<compile_context>
chip_gen: v5e
topology: v5e:2x2
jax: 0.10.0
libtpu: 0.0.40
codegen_flags: <defaults>
</compile_context>

<pallas_src>
import functools

import numpy as np
import jax
import jax.numpy as jnp
from jax.experimental import pallas as pl
from jax.experimental.pallas import tpu as pltpu

N_QUBITS = 4
N_STATES = 2 ** N_QUBITS                     # 16
_QC_ROWS = 2 * N_QUBITS + 2 * N_STATES       # 4 bit rows + 4 pad rows + 32 unitary rows = 40
_QC_LANES = 2 * N_STATES                     # 32 lanes: [Re | Im]
_WVB_ROWS = N_STATES + 1                     # 16 folded-weight rows + 1 bias row


# ---------------------------------------------------------------------------
# Host-side, weight-only prep (run ONCE per weight set, not per forward call)
# ---------------------------------------------------------------------------
def _build_circuit_unitary(naqft_w):
    """16x16 complex128 unitary of the CRZ/Hadamard (weight-only) part of naqft_layer."""
    ks = np.arange(N_STATES)
    h2 = np.array([[1.0, 1.0], [1.0, -1.0]], np.complex128) / np.sqrt(2.0)
    i2 = np.eye(2, dtype=np.complex128)

    def crz(phi, ctrl, tgt):
        cb = ((ks >> (N_QUBITS - 1 - ctrl)) & 1).astype(np.float64)
        tb = ((ks >> (N_QUBITS - 1 - tgt)) & 1).astype(np.float64)
        ang = cb * np.where(tb == 0, -0.5, 0.5) * phi      # CRZ = diag(1,1,e^-ip/2,e^+ip/2)
        return np.diag(np.exp(1j * ang))

    def hadamard(wire):
        mats = [i2] * N_QUBITS
        mats[wire] = h2
        m = mats[0]
        for mm in mats[1:]:
            m = np.kron(m, mm)                              # wire 0 = most-significant bit
        return m

    u = np.eye(N_STATES, dtype=np.complex128)
    for i in range(N_QUBITS):
        for j in range(i + 1, N_QUBITS):
            u = crz(float(naqft_w[i, j]), i, j) @ u
        u = hadamard(i) @ u
    return u


def prepare_qellm_constants(params, weight_dtype=jnp.bfloat16):
    """Fold everything weight-only into packed slabs (cache the result).

    weight_dtype: dtype of the streamed folded-weight/bias slab.  bf16 halves
    the HBM traffic of the only operand that scales with n_vocab; use float32
    if bit-tight logits are required.
    """
    mps = np.asarray(params["mps_tensors"], np.float32)     # (H, bond, in, bond)
    n_t, bond, in_dim, bond2 = mps.shape
    assert bond == bond2 == in_dim == N_QUBITS, (
        "einsum 'bi,aib->ba' repetition + AngleEmbedding require "
        "input_dim == bond_dim == N_QUBITS")
    final_w = np.asarray(params["final_w"], np.float64)     # (V, N_QUBITS)
    final_b = np.asarray(params["final_b"], np.float64)     # (V,)
    assert final_w.shape[1] == N_QUBITS

    # MPS tensors pre-transposed to (t, batch, bond, in) for per-row contraction.
    mps_t = np.transpose(mps, (0, 3, 1, 2)).astype(np.float32)

    # Basis bookkeeping (wire 0 = MSB, PennyLane default.qubit convention).
    ks = np.arange(N_STATES)
    bits = np.stack([(ks >> (N_QUBITS - 1 - w)) & 1 for w in range(N_QUBITS)],
                    axis=0).astype(np.float64)              # (4, 16)
    phase = (-1j) ** bits.sum(axis=0)                       # RX|0> phase: (-i)^popcount
    zmat = (1.0 - 2.0 * bits).T                             # (16, 4): <Z_w> signs

    # Circuit unitary with the RX phase diagonal folded in: U' = U @ diag(phase).
    u = _build_circuit_unitary(np.asarray(params["naqft_weights"], np.float64))
    u_f = u * phase[None, :]
    # [Re(U'^T) | Im(U'^T)]  -> psi_cat = mag @ ucatT gives [Re(psi) | Im(psi)].
    ucat_t = np.concatenate([u_f.real.T, u_f.imag.T], axis=1)        # (16, 32)

    # Packed quantum-constant slab (40, 32):
    #   rows 0..3   : per-wire basis bits (lanes >= 16 zero-padded)
    #   rows 4..7   : zero padding (keeps the unitary slice sublane-tile aligned)
    #   rows 8..39  : ucatT padded with 16 zero rows (dummy mag lanes contribute 0)
    qconst = np.zeros((_QC_ROWS, _QC_LANES), np.float32)
    qconst[:N_QUBITS, :N_STATES] = bits
    qconst[2 * N_QUBITS:2 * N_QUBITS + N_STATES, :] = ucat_t

    # Fold <Z> projection into the final linear: logits = probs @ (zmat @ W^T) + b.
    # Dedup'd slab (17 rows): no W' duplication -- probs = Re^2 + Im^2 is formed
    # in the prologue kernel instead.
    wprime = zmat @ final_w.T                                         # (16, V)
    wvb = np.concatenate([wprime, final_b[None, :]], axis=0)          # (17, V)

    return {"mps_t": jnp.asarray(mps_t),
            "qconst": jnp.asarray(qconst),
            "wvb": jnp.asarray(wvb, dtype=weight_dtype)}


# ---------------------------------------------------------------------------
# Pallas kernels
# ---------------------------------------------------------------------------
def qellm_prologue_kernel(x_ref, mps_ref, qc_ref, probs_ref):
    """MPS chain -> RX magnitudes -> folded unitary -> basis-state probabilities."""
    res = x_ref[...]                                         # (B, input_dim)

    # MPSLayer: result = einsum('bi,aib->ba', result, T) for each tensor,
    # with T pre-transposed to (B, bond, in) on the host.
    for t in range(mps_ref.shape[0]):                        # static unroll (hidden_dim)
        tt = mps_ref[t]                                      # (B, bond, in)
        res = jnp.sum(tt * res[:, None, :], axis=-1)         # (B, bond)

    # RX angle embedding magnitudes: mag[b,k] = prod_w (cos if bit=0 else sin).
    half = res * 0.5
    c = jnp.cos(half)                                        # (B, N_QUBITS)
    d = jnp.sin(half) - c                                     # select via c + (s-c)*bit
    mag = c[:, 0:1] + d[:, 0:1] * qc_ref[0:1, :]             # (B, 32); lanes>=16 dummy
    for w in range(1, N_QUBITS):
        mag = mag * (c[:, w:w + 1] + d[:, w:w + 1] * qc_ref[w:w + 1, :])

    # psi_cat = [Re(psi) | Im(psi)] = mag @ [Re(U'^T) | Im(U'^T)]   (one tiny dot;
    # zero ucat rows cancel the dummy mag lanes >= 16).
    ucat_t = qc_ref[2 * N_QUBITS:, :]                        # (32, 32), rows>=16 zero
    psi_cat = jnp.dot(mag, ucat_t, preferred_element_type=jnp.float32,
                      precision=jax.lax.Precision.HIGHEST)   # (B, 32)
    sq = psi_cat * psi_cat                                   # [Re^2 | Im^2]
    probs_ref[...] = sq[:, :N_STATES] + sq[:, N_STATES:]     # (B, 16)


def qellm_vocab_kernel(probs_ref, wvb_ref, out_ref):
    """logits = probs @ (zmat @ W_f^T) + b  -- one dot per vocab tile."""
    wfold = wvb_ref[:N_STATES, :]                            # (16, TV)
    bias = wvb_ref[N_STATES:, :].astype(jnp.float32)         # (1, TV)
    probs = probs_ref[...]                                   # (B, 16) f32
    if wfold.dtype == jnp.float32:
        # f32 slab: keep HIGHEST so f32->bf16 MXU decomposition stays accurate.
        out_ref[...] = jnp.dot(probs, wfold, preferred_element_type=jnp.float32,
                               precision=jax.lax.Precision.HIGHEST) + bias
    else:
        # bf16 slab: single-pass bf16 MXU dot with f32 accumulation.
        out_ref[...] = jnp.dot(probs.astype(wfold.dtype), wfold,
                               preferred_element_type=jnp.float32) + bias
    # TODO(synk): if downstream accepts bf16 logits, emit bf16 here to halve
    #             the output writeback stream.


# ---------------------------------------------------------------------------
# Wrappers
# ---------------------------------------------------------------------------
def _cap_vocab_tile(requested, n_vocab, slab_itemsize, batch,
                    vmem_budget_bytes=12 * 1024 * 1024):
    """Largest lane-dense tile <= requested whose double-buffered footprint fits
    a conservative scoped-VMEM budget (safe on v5e 16 MiB / v7x 32 MiB defaults)."""
    per_col = 2 * (_WVB_ROWS * slab_itemsize + batch * 4)    # 2 buffers (in + out)
    max_cols = max(128, (vmem_budget_bytes // per_col) // 128 * 128)
    tv = min(int(requested), max_cols, n_vocab)
    return max(128, (tv // 128) * 128)


@functools.partial(jax.jit, static_argnames=("vocab_tile",))
def _qellm_pallas(hidden, mps_t, qconst, wvb, vocab_tile=None):
    batch = hidden.shape[0]
    n_vocab = wvb.shape[1]

    # Quantum prologue: computed ONCE (not per vocab tile).  Tiny gridless call.
    probs = pl.pallas_call(
        qellm_prologue_kernel,
        out_shape=jax.ShapeDtypeStruct((batch, N_STATES), jnp.float32),
    )(hidden, mps_t, qconst)

    out_shape = jax.ShapeDtypeStruct((batch, n_vocab), jnp.float32)

    if (vocab_tile is None or vocab_tile >= n_vocab
            or vocab_tile % 128 != 0 or n_vocab % vocab_tile != 0):
        # Small vocab: gridless call, everything resident in VMEM.
        return pl.pallas_call(qellm_vocab_kernel, out_shape=out_shape)(probs, wvb)

    # Large vocab: lane-dense tiles over the vocab axis; the body is a pure
    # weight stream + one MXU dot, so it pipelines cleanly.
    tv = vocab_tile
    grid = (n_vocab // tv,)
    step_bytes = _WVB_ROWS * tv * wvb.dtype.itemsize
    # Megacore sharding only pays when each core gets substantial work (v7x).
    semantics = (("parallel",) if (grid[0] >= 2 and step_bytes >= (1 << 20))
                 else ("arbitrary",))
    return pl.pallas_call(
        qellm_vocab_kernel,
        out_shape=out_shape,
        grid=grid,
        in_specs=[
            pl.BlockSpec((batch, N_STATES), lambda v: (0, 0)),     # grid-invariant (tiny)
            pl.BlockSpec((_WVB_ROWS, tv), lambda v: (0, v)),       # the only real stream
        ],
        out_specs=pl.BlockSpec((batch, tv), lambda v: (0, v)),
        compiler_params=pltpu.CompilerParams(dimension_semantics=semantics),
    )(probs, wvb)


def quantum_enhanced_llm_forward(prepared, base_model, input_ids, vocab_tile=None):
    base_out = base_model(input_ids)
    hidden = jnp.asarray(base_out["hidden_states"], jnp.float32)     # (B, input_dim)
    assert hidden.shape == (N_QUBITS, N_QUBITS), (
        "einsum 'bi,aib->ba' + AngleEmbedding force batch == input_dim "
        "== bond_dim == N_QUBITS")
    return _qellm_pallas(hidden, prepared["mps_t"], prepared["qconst"],
                         prepared["wvb"], vocab_tile=vocab_tile)


# ---------------------------------------------------------------------------
# Independent numpy reference: gate-by-gate complex128 statevector simulation
# (does NOT reuse the kernel's folded unitary -> non-circular validation).
# TODO(synk): a PennyLane default.qubit cross-check is not possible in-script
#             (no network / external deps); this exact simulation stands in.
# ---------------------------------------------------------------------------
def reference_forward(hidden, params):
    hidden = np.asarray(hidden, np.float64)
    mps = np.asarray(params["mps_tensors"], np.float64)
    res = hidden
    for t in range(mps.shape[0]):
        res = np.einsum("bi,aib->ba", res, mps[t])

    w = np.asarray(params["naqft_weights"], np.float64)
    h2 = np.array([[1.0, 1.0], [1.0, -1.0]], np.complex128) / np.sqrt(2.0)
    batch = res.shape[0]
    ev = np.zeros((batch, N_QUBITS))
    for b in range(batch):
        psi = np.array([1.0 + 0j])
        for q in range(N_QUBITS):                            # RX embedding, wire0 = MSB
            th = res[b, q] / 2.0
            psi = np.kron(psi, np.array([np.cos(th), -1j * np.sin(th)]))
        psi = psi.reshape((2,) * N_QUBITS)
        for i in range(N_QUBITS):
            for j in range(i + 1, N_QUBITS):
                phi = w[i, j]
                diag = np.array([[1.0, 1.0],
                                 [np.exp(-0.5j * phi), np.exp(0.5j * phi)]],
                                np.complex128)
                shape = [2 if ax in (i, j) else 1 for ax in range(N_QUBITS)]
                psi = psi * diag.reshape(shape)
            psi = np.moveaxis(np.tensordot(h2, psi, axes=([1], [i])), 0, i)
        probs = np.abs(psi.reshape(-1)) ** 2
        for q in range(N_QUBITS):
            bitq = (np.arange(N_STATES) >> (N_QUBITS - 1 - q)) & 1
            ev[b, q] = np.sum(probs * (1.0 - 2.0 * bitq))

    return ev @ np.asarray(params["final_w"], np.float64).T + \
        np.asarray(params["final_b"], np.float64)


class BaseModelStub:
    """Deterministic stand-in for the opaque external `base_model`."""
    # TODO(synk): the real base_model is external; stubbed as embedding + mean-pool.

    def __init__(self, n_vocab, dim, key):
        self.n_vocab = n_vocab
        self.embedding = 0.1 * jax.random.normal(key, (n_vocab, dim), jnp.float32)

    def __call__(self, ids):
        return {"hidden_states": self.embedding[ids].mean(axis=1)}   # (B, input_dim)


def run_case(key, n_vocab, vocab_tile, weight_dtype, tol):
    batch, seq = N_QUBITS, 8
    input_dim = bond_dim = N_QUBITS
    hidden_dim = 3

    k_emb, k_mps, k_w, k_fw, k_fb, k_ids = jax.random.split(key, 6)
    base_model = BaseModelStub(n_vocab, input_dim, k_emb)
    params = {
        "mps_tensors": 0.5 * jax.random.normal(
            k_mps, (hidden_dim, bond_dim, input_dim, bond_dim), jnp.float32),
        "naqft_weights": jax.random.normal(k_w, (N_QUBITS, N_QUBITS), jnp.float32),
        "final_w": 0.5 * jax.random.normal(k_fw, (n_vocab, N_QUBITS), jnp.float32),
        "final_b": 0.1 * jax.random.normal(k_fb, (n_vocab,), jnp.float32),
    }
    input_ids = jax.random.randint(k_ids, (batch, seq), 0, n_vocab)

    prepared = prepare_qellm_constants(params, weight_dtype=weight_dtype)
    if vocab_tile is not None:
        vocab_tile = _cap_vocab_tile(vocab_tile, n_vocab,
                                     jnp.dtype(weight_dtype).itemsize, batch)

    logits = quantum_enhanced_llm_forward(prepared, base_model, input_ids,
                                          vocab_tile=vocab_tile)
    logits = jax.block_until_ready(logits)

    hidden = base_model(input_ids)["hidden_states"]
    ref = reference_forward(hidden, params)
    assert logits.shape == (batch, n_vocab)
    err = float(np.max(np.abs(np.asarray(logits, np.float64) - ref)))
    assert err < tol, f"max abs err = {err} (tol {tol})"


if __name__ == "__main__":
    root = jax.random.PRNGKey(0)
    k_small, k_big = jax.random.split(root)

    # Case 1: tiny vocab (512), f32 folded weights, gridless fused path,
    # tight tolerance (bit-faithful to the f32 module).
    run_case(k_small, n_vocab=512, vocab_tile=None,
             weight_dtype=jnp.float32, tol=1e-3)

    # Case 2: larger vocab (16384), bf16 folded weight/bias slab (halves the
    # dominant HBM stream) with a large lane-dense vocab tile (8192, auto-capped
    # to the scoped-VMEM budget).  Tolerance covers bf16 weight quantization.
    run_case(k_big, n_vocab=16384, vocab_tile=8192,
             weight_dtype=jnp.bfloat16, tol=5e-2)

    print("KERNEL_OK")
</pallas_src>

<mosaic_0001>
module attributes {stable_mosaic.version = 11 : i64} {
  func.func @qellm_vocab_kernel(%arg0: memref<4x16xf32, #tpu.memory_space<vmem>>, %arg1: memref<17x512xf32, #tpu.memory_space<vmem>>, %arg2: memref<4x512xf32, #tpu.memory_space<vmem>>) attributes {dimension_semantics = [], scalar_prefetch = 0 : i64, scratch_operands = 0 : i64, tpu.core_type = #tpu.core_type<tc>} {
    %c0 = arith.constant 0 : index
    %c0_0 = arith.constant 0 : index
    %0 = vector.load %arg1[%c0, %c0_0] : memref<17x512xf32, #tpu.memory_space<vmem>>, vector<16x512xf32>
    %c16 = arith.constant 16 : index
    %c0_1 = arith.constant 0 : index
    %1 = vector.load %arg1[%c16, %c0_1] : memref<17x512xf32, #tpu.memory_space<vmem>>, vector<1x512xf32>
    %c0_2 = arith.constant 0 : index
    %c0_3 = arith.constant 0 : index
    %2 = vector.load %arg0[%c0_2, %c0_3] : memref<4x16xf32, #tpu.memory_space<vmem>>, vector<4x16xf32>
    %cst = arith.constant dense<0.000000e+00> : vector<4x512xf32>
    %3 = tpu.matmul %2, %0, %cst {dimension_numbers = #tpu.dot_dimension_numbers<[1], [0], [0], [1], [0, 0, 1, 1], [], []>, precision = #tpu.contract_precision<fp32>} : vector<4x16xf32>, vector<16x512xf32>, vector<4x512xf32> -> vector<4x512xf32>
    %4 = vector.broadcast %1 : vector<1x512xf32> to vector<4x512xf32>
    %5 = arith.addf %3, %4 : vector<4x512xf32>
    %c0_4 = arith.constant 0 : index
    %c0_5 = arith.constant 0 : index
    %6 = vector.load %arg2[%c0_4, %c0_5] : memref<4x512xf32, #tpu.memory_space<vmem>>, vector<4x512xf32>
    tpu.vector_store %arg2[%c0_4, %c0_5], %5 {strides = array<i32>} : memref<4x512xf32, #tpu.memory_space<vmem>>, vector<4x512xf32>,
    return
  }
}

module attributes {stable_mosaic.version = 11 : i64} {
  func.func @qellm_prologue_kernel(%arg0: memref<4x4xf32, #tpu.memory_space<vmem>>, %arg1: memref<3x4x4x4xf32, #tpu.memory_space<vmem>>, %arg2: memref<40x32xf32, #tpu.memory_space<vmem>>, %arg3: memref<4x16xf32, #tpu.memory_space<vmem>>) attributes {dimension_semantics = [], scalar_prefetch = 0 : i64, scratch_operands = 0 : i64, tpu.core_type = #tpu.core_type<tc>} {
    %c0 = arith.constant 0 : index
    %c0_0 = arith.constant 0 : index
    %0 = vector.load %arg0[%c0, %c0_0] : memref<4x4xf32, #tpu.memory_space<vmem>>, vector<4x4xf32>
    %c0_1 = arith.constant 0 : index
    %c0_2 = arith.constant 0 : index
    %c0_3 = arith.constant 0 : index
    %c0_4 = arith.constant 0 : index
    %1 = vector.load %arg1[%c0_1, %c0_2, %c0_3, %c0_4] : memref<3x4x4x4xf32, #tpu.memory_space<vmem>>, vector<1x4x4x4xf32>
    %2 = vector.shape_cast %1 : vector<1x4x4x4xf32> to vector<4x4x4xf32>
    %3 = vector.shape_cast %0 : vector<4x4xf32> to vector<4x1x4xf32>
    %4 = vector.broadcast %3 : vector<4x1x4xf32> to vector<4x4x4xf32>
    %5 = arith.mulf %2, %4 : vector<4x4x4xf32>
    %cst = arith.constant dense<0.000000e+00> : vector<4x4xf32>
    %6 = vector.multi_reduction <add>, %5, %cst [2] : vector<4x4x4xf32> to vector<4x4xf32>
    %c1 = arith.constant 1 : index
    %c0_5 = arith.constant 0 : index
    %c0_6 = arith.constant 0 : index
    %c0_7 = arith.constant 0 : index
    %7 = vector.load %arg1[%c1, %c0_5, %c0_6, %c0_7] : memref<3x4x4x4xf32, #tpu.memory_space<vmem>>, vector<1x4x4x4xf32>
    %8 = vector.shape_cast %7 : vector<1x4x4x4xf32> to vector<4x4x4xf32>
    %9 = vector.shape_cast %6 : vector<4x4xf32> to vector<4x1x4xf32>
    %10 = vector.broadcast %9 : vector<4x1x4xf32> to vector<4x4x4xf32>
    %11 = arith.mulf %8, %10 : vector<4x4x4xf32>
    %cst_8 = arith.constant dense<0.000000e+00> : vector<4x4xf32>
    %12 = vector.multi_reduction <add>, %11, %cst_8 [2] : vector<4x4x4xf32> to vector<4x4xf32>
    %c2 = arith.constant 2 : index
    %c0_9 = arith.constant 0 : index
    %c0_10 = arith.constant 0 : index
    %c0_11 = arith.constant 0 : index
    %13 = vector.load %arg1[%c2, %c0_9, %c0_10, %c0_11] : memref<3x4x4x4xf32, #tpu.memory_space<vmem>>, vector<1x4x4x4xf32>
    %14 = vector.shape_cast %13 : vector<1x4x4x4xf32> to vector<4x4x4xf32>
    %15 = vector.shape_cast %12 : vector<4x4xf32> to vector<4x1x4xf32>
    %16 = vector.broadcast %15 : vector<4x1x4xf32> to vector<4x4x4xf32>
    %17 = arith.mulf %14, %16 : vector<4x4x4xf32>
    %cst_12 = arith.constant dense<0.000000e+00> : vector<4x4xf32>
    %18 = vector.multi_reduction <add>, %17, %cst_12 [2] : vector<4x4x4xf32> to vector<4x4xf32>
    %cst_13 = arith.constant 5.000000e-01 : f32
    %19 = vector.broadcast %cst_13 : f32 to vector<4x4xf32>
    %20 = arith.mulf %18, %19 : vector<4x4xf32>
    %21 = math.cos %20 : vector<4x4xf32>
    %22 = math.sin %20 : vector<4x4xf32>
    %23 = arith.subf %22, %21 : vector<4x4xf32>
    %24 = vector.extract_strided_slice %21 {offsets = [0, 0], sizes = [4, 1], strides = [1, 1]} : vector<4x4xf32> to vector<4x1xf32>
    %25 = vector.extract_strided_slice %23 {offsets = [0, 0], sizes = [4, 1], strides = [1, 1]} : vector<4x4xf32> to vector<4x1xf32>
    %c0_14 = arith.constant 0 : index
    %c0_15 = arith.constant 0 : index
    %26 = vector.load %arg2[%c0_14, %c0_15] : memref<40x32xf32, #tpu.memory_space<vmem>>, vector<1x32xf32>
    %27 = vector.broadcast %25 : vector<4x1xf32> to vector<4x32xf32>
    %28 = vector.broadcast %26 : vector<1x32xf32> to vector<4x32xf32>
    %29 = arith.mulf %27, %28 : vector<4x32xf32>
    %30 = vector.broadcast %24 : vector<4x1xf32> to vector<4x32xf32>
    %31 = arith.addf %30, %29 : vector<4x32xf32>
    %32 = vector.extract_strided_slice %21 {offsets = [0, 1], sizes = [4, 1], strides = [1, 1]} : vector<4x4xf32> to vector<4x1xf32>
    %33 = vector.extract_strided_slice %23 {offsets = [0, 1], sizes = [4, 1], strides = [1, 1]} : vector<4x4xf32> to vector<4x1xf32>
    %c1_16 = arith.constant 1 : index
    %c0_17 = arith.constant 0 : index
    %34 = vector.load %arg2[%c1_16, %c0_17] : memref<40x32xf32, #tpu.memory_space<vmem>>, vector<1x32xf32>
    %35 = vector.broadcast %33 : vector<4x1xf32> to vector<4x32xf32>
    %36 = vector.broadcast %34 : vector<1x32xf32> to vector<4x32xf32>
    %37 = arith.mulf %35, %36 : vector<4x32xf32>
    %38 = vector.broadcast %32 : vector<4x1xf32> to vector<4x32xf32>
    %39 = arith.addf %38, %37 : vector<4x32xf32>
    %40 = arith.mulf %31, %39 : vector<4x32xf32>
    %41 = vector.extract_strided_slice %21 {offsets = [0, 2], sizes = [4, 1], strides = [1, 1]} : vector<4x4xf32> to vector<4x1xf32>
    %42 = vector.extract_strided_slice %23 {offsets = [0, 2], sizes = [4, 1], strides = [1, 1]} : vector<4x4xf32> to vector<4x1xf32>
    %c2_18 = arith.constant 2 : index
    %c0_19 = arith.constant 0 : index
    %43 = vector.load %arg2[%c2_18, %c0_19] : memref<40x32xf32, #tpu.memory_space<vmem>>, vector<1x32xf32>
    %44 = vector.broadcast %42 : vector<4x1xf32> to vector<4x32xf32>
    %45 = vector.broadcast %43 : vector<1x32xf32> to vector<4x32xf32>
    %46 = arith.mulf %44, %45 : vector<4x32xf32>
    %47 = vector.broadcast %41 : vector<4x1xf32> to vector<4x32xf32>
    %48 = arith.addf %47, %46 : vector<4x32xf32>
    %49 = arith.mulf %40, %48 : vector<4x32xf32>
    %50 = vector.extract_strided_slice %21 {offsets = [0, 3], sizes = [4, 1], strides = [1, 1]} : vector<4x4xf32> to vector<4x1xf32>
    %51 = vector.extract_strided_slice %23 {offsets = [0, 3], sizes = [4, 1], strides = [1, 1]} : vector<4x4xf32> to vector<4x1xf32>
    %c3 = arith.constant 3 : index
    %c0_20 = arith.constant 0 : index
    %52 = vector.load %arg2[%c3, %c0_20] : memref<40x32xf32, #tpu.memory_space<vmem>>, vector<1x32xf32>
    %53 = vector.broadcast %51 : vector<4x1xf32> to vector<4x32xf32>
    %54 = vector.broadcast %52 : vector<1x32xf32> to vector<4x32xf32>
    %55 = arith.mulf %53, %54 : vector<4x32xf32>
    %56 = vector.broadcast %50 : vector<4x1xf32> to vector<4x32xf32>
    %57 = arith.addf %56, %55 : vector<4x32xf32>
    %58 = arith.mulf %49, %57 : vector<4x32xf32>
    %c8 = arith.constant 8 : index
    %c0_21 = arith.constant 0 : index
    %59 = vector.load %arg2[%c8, %c0_21] : memref<40x32xf32, #tpu.memory_space<vmem>>, vector<32x32xf32>
    %cst_22 = arith.constant dense<0.000000e+00> : vector<4x32xf32>
    %60 = tpu.matmul %58, %59, %cst_22 {dimension_numbers = #tpu.dot_dimension_numbers<[1], [0], [0], [1], [0, 0, 1, 1], [], []>, precision = #tpu.contract_precision<fp32>} : vector<4x32xf32>, vector<32x32xf32>, vector<4x32xf32> -> vector<4x32xf32>
    %61 = arith.mulf %60, %60 : vector<4x32xf32>
    %62 = vector.extract_strided_slice %61 {offsets = [0, 0], sizes = [4, 16], strides = [1, 1]} : vector<4x32xf32> to vector<4x16xf32>
    %63 = vector.extract_strided_slice %61 {offsets = [0, 16], sizes = [4, 16], strides = [1, 1]} : vector<4x32xf32> to vector<4x16xf32>
    %64 = arith.addf %62, %63 : vector<4x16xf32>
    %c0_23 = arith.constant 0 : index
    %c0_24 = arith.constant 0 : index
    %65 = vector.load %arg3[%c0_23, %c0_24] : memref<4x16xf32, #tpu.memory_space<vmem>>, vector<4x16xf32>
    tpu.vector_store %arg3[%c0_23, %c0_24], %64 {strides = array<i32>} : memref<4x16xf32, #tpu.memory_space<vmem>>, vector<4x16xf32>,
    return
  }
}

</mosaic_0001>

<llo_original>
// kernel: _qellm_pallas.3
$region0: #{_qellm_pallas.3}
  #allocation0 [shape = 'u32[]', space=smem, size = 0x4, offset = 0x4, fixed_abs, tag = 'smem constant byte address 0x4 - core index']
  #allocation1 [shape = 'u32[72,128]{1,0:T(1,128)}', space=vmem, size = 0x9000, scoped, tag = 'internal scratch']
  %s0 = inlined_call_operand.vmem [shape: f32[4,16], index: 0, kind: input, shape index: {}]
  %s1 = inlined_call_operand.hbm [shape: f32[17,512], index: 1, kind: input, shape index: {}]
  %s2 = inlined_call_operand.hbm [shape: f32[4,512], index: 2, kind: output, shape index: {}]
  %s3 = sld [smem:[#allocation0]]
  $region22: #{_qellm_pallas.3} parent=0
    _
  %s5 = ssub.s32 1, %s3
  %s6 = scalar_select 0, %s5, %s3
  $region1: #{_qellm_pallas.3} parent=0
    #allocation2 [shape = 'u8[49152]{0}', space=vmem, size = 0xc000, scoped, tag = 'input window, operand 1, single buffered']
    #allocation3 [shape = 's32[1]{0}', space=sflag, size = 0x4, scoped, tag = 'scoped memory for _qellm_pallas.3']
    #allocation4 [shape = 's32[1]{0}', space=sflag, size = 0x4, scoped, tag = 'scoped memory for _qellm_pallas.3']
    #allocation5 [shape = 'u8[8192]{0}', space=vmem, size = 0x2000, scoped, tag = 'output window, operand 0, single buffered']
    %7 = vsyncpa [#allocation3], 0
    %8 = vsyncpa [#allocation4], 0
    // Predicated region
    $region2: #{_qellm_pallas.3} parent=1 // pred_check
      _
    $region3: #{_qellm_pallas.3} parent=1 // pred_check_branch
      %10 = sbr.rel (0) target = $region5
    $region4: #{_qellm_pallas.3} parent=1 // pred_region
      _
    $region5: #{_qellm_pallas.3} parent=1 // pred_fallthru
      _
    // Predicated region
    $region6: #{_qellm_pallas.3} parent=1 // pred_check
      _
    $region7: #{_qellm_pallas.3} parent=1 // pred_check_branch
      %12 = sbr.rel (0) target = $region9
    $region8: #{_qellm_pallas.3} parent=1 // pred_region
      %14 = vsyncadd [#allocation3], 0
      %s15 = sshll.u32 %s1, 4
      %s16 = int_to_ptr.hbm [resolvable:$true] %s15
      %s17 = sshll.u32 [#allocation2], 4
      %s18 = int_to_ptr.vmem [resolvable:$true] %s17
      %23 = dma.hbm_to_vmem [thread:$0]  %s16, 1536, %s18, [#allocation3], 512, 512, 32
    $region9: #{_qellm_pallas.3} parent=1 // pred_fallthru
      _
    // Predicated region
    $region10: #{_qellm_pallas.3} parent=1 // pred_check
      _
    $region11: #{_qellm_pallas.3} parent=1 // pred_check_branch
      %25 = sbr.rel (0) target = $region13
    $region12: #{_qellm_pallas.3} parent=1 // pred_region
      %27 = dma.done [#allocation3], 1536
    $region13: #{_qellm_pallas.3} parent=1 // pred_fallthru
      _
    %v28 = vld [vmem:[#allocation2] sm:$0xff]
    %v29 = vld [vmem:[#allocation2 + $0x8] sm:$0xff]
    %v30 = vld [vmem:[#allocation2 + $0x10] sm:$0xff]
    %v31 = vld [vmem:[#allocation2 + $0x18] sm:$0xff]
    %v32 = vld [vmem:[#allocation2 + $0x20] sm:$0xff]
    %v33 = vld [vmem:[#allocation2 + $0x28] sm:$0xff]
    %v34 = vld [vmem:[#allocation2 + $0x30] sm:$0xff]
    %v35 = vld [vmem:[#allocation2 + $0x38] sm:$0xff]
    %s36 = scalar_lea.vmem [#allocation2], 64
    %v37 = vld [vmem:[%s36] ss:$8 sm:$0xf]
    %v38 = vld [vmem:[%s0] sm:$0xf]
    %v40 = vperm.slane %v37, 0
    %v41 = vperm.slane %v37, 1
    %v42 = vperm.slane %v37, 2
    %v43 = vperm.slane %v37, 3
    %vm48 = vcmask 130048
    %v50 = vsel %vm48, %v38, 0
    %52 = vmatpush.msra.mxu0 0.0
    %53 = vmatpush.msra.mxu0 0.0
    %54 = vmatpush.msra.mxu0 0.0
    %55 = vmatpush.msra.mxu0 0.0
    %56 = vmatpush.msra.mxu0 0.0
    %57 = vmatpush.msra.mxu0 0.0
    %58 = vmatpush.msra.mxu0 0.0
    %59 = vmatpush.msra.mxu0 0.0
    %60 = vmatpush.msra.mxu0 0.0
    %61 = vmatpush.msra.mxu0 0.0
    %62 = vmatpush.msra.mxu0 0.0
    %63 = vmatpush.msra.mxu0 0.0
    %64 = vmatpush.msra.mxu0 0.0
    %65 = vmatpush.msra.mxu0 0.0
    %v66 = vand.u32 %v32, 4294901760
    %67 = vmatpush.msra.mxu0 %v66
    %v68 = vand.u32 %v28, 4294901760
    %69 = vmatpush.msra.mxu0 %v68
    %v70 = vand.u32 %v50, 4294901760
    %v71 = vsub.f32 %v50, %v70
    %v72 = vand.u32 %v71, 4294901760
    %v73 = vsub.f32 %v71, %v72
    %v74 = vand.u32 %v73, 4294901760
    %75 = vmatmul.f32.gmra.mxu0 %v74
    %v76 = vpop.f32.mrf.mxu0
    %v77 = vadd.f32 %v40, %v76
    %78 = vdwg.mxu0
    %79 = vmatpush.msra.mxu0 0.0
    %80 = vmatpush.msra.mxu0 0.0
    %81 = vmatpush.msra.mxu0 0.0
    %82 = vmatpush.msra.mxu0 0.0
    %83 = vmatpush.msra.mxu0 0.0
    %84 = vmatpush.msra.mxu0 0.0
    %85 = vmatpush.msra.mxu0 0.0
    %86 = vmatpush.msra.mxu0 0.0
    %87 = vmatpush.msra.mxu0 0.0
    %88 = vmatpush.msra.mxu0 0.0
    %89 = vmatpush.msra.mxu0 0.0
    %90 = vmatpush.msra.mxu0 0.0
    %91 = vmatpush.msra.mxu0 0.0
    %92 = vmatpush.msra.mxu0 0.0
    %v93 = vand.u32 %v32, 4294901760
    %v94 = vsub.f32 %v32, %v93
    %v95 = vand.u32 %v94, 4294901760
    %v96 = vsub.f32 %v94, %v95
    %v97 = vand.u32 %v96, 4294901760
    %98 = vmatpush.msra.mxu0 %v97
    %v99 = vand.u32 %v28, 4294901760
    %v100 = vsub.f32 %v28, %v99
    %v101 = vand.u32 %v100, 4294901760
    %v102 = vsub.f32 %v100, %v101
    %v103 = vand.u32 %v102, 4294901760
    %104 = vmatpush.msra.mxu0 %v103
    %v105 = vand.u32 %v50, 4294901760
    %106 = vmatmul.f32.gmra.mxu0 %v105
    %v107 = vpop.f32.mrf.mxu0
    %v108 = vadd.f32 %v77, %v107
    %109 = vdwg.mxu0
    %110 = vmatpush.msra.mxu0 0.0
    %111 = vmatpush.msra.mxu0 0.0
    %112 = vmatpush.msra.mxu0 0.0
    %113 = vmatpush.msra.mxu0 0.0
    %114 = vmatpush.msra.mxu0 0.0
    %115 = vmatpush.msra.mxu0 0.0
    %116 = vmatpush.msra.mxu0 0.0
    %117 = vmatpush.msra.mxu0 0.0
    %118 = vmatpush.msra.mxu0 0.0
    %119 = vmatpush.msra.mxu0 0.0
    %120 = vmatpush.msra.mxu0 0.0
    %121 = vmatpush.msra.mxu0 0.0
    %122 = vmatpush.msra.mxu0 0.0
    %123 = vmatpush.msra.mxu0 0.0
    %v124 = vand.u32 %v32, 4294901760
    %v125 = vsub.f32 %v32, %v124
    %126 = vmatpush.msra.mxu0 %v125
    %v127 = vand.u32 %v28, 4294901760
    %v128 = vsub.f32 %v28, %v127
    %129 = vmatpush.msra.mxu0 %v128
    %v130 = vand.u32 %v50, 4294901760
    %v131 = vsub.f32 %v50, %v130
    %132 = vmatmul.f32.gmra.mxu0 %v131
    %v133 = vpop.f32.mrf.mxu0
    %v134 = vadd.f32 %v108, %v133
    %135 = vdwg.mxu0
    %136 = vmatpush.msra.mxu0 0.0
    %137 = vmatpush.msra.mxu0 0.0
    %138 = vmatpush.msra.mxu0 0.0
    %139 = vmatpush.msra.mxu0 0.0
    %140 = vmatpush.msra.mxu0 0.0
    %141 = vmatpush.msra.mxu0 0.0
    %142 = vmatpush.msra.mxu0 0.0
    %143 = vmatpush.msra.mxu0 0.0
    %144 = vmatpush.msra.mxu0 0.0
    %145 = vmatpush.msra.mxu0 0.0
    %146 = vmatpush.msra.mxu0 0.0
    %147 = vmatpush.msra.mxu0 0.0
    %148 = vmatpush.msra.mxu0 0.0
    %149 = vmatpush.msra.mxu0 0.0
    %v150 = vand.u32 %v32, 4294901760
    %151 = vmatpush.msra.mxu0 %v150
    %v152 = vand.u32 %v28, 4294901760
    %153 = vmatpush.msra.mxu0 %v152
    %v154 = vand.u32 %v50, 4294901760
    %v155 = vsub.f32 %v50, %v154
    %v156 = vand.u32 %v155, 4294901760
    %157 = vmatmul.f32.gmra.mxu0 %v156
    %v158 = vpop.f32.mrf.mxu0
    %v159 = vadd.f32 %v134, %v158
    %160 = vdwg.mxu0
    %161 = vmatpush.msra.mxu0 0.0
    %162 = vmatpush.msra.mxu0 0.0
    %163 = vmatpush.msra.mxu0 0.0
    %164 = vmatpush.msra.mxu0 0.0
    %165 = vmatpush.msra.mxu0 0.0
    %166 = vmatpush.msra.mxu0 0.0
    %167 = vmatpush.msra.mxu0 0.0
    %168 = vmatpush.msra.mxu0 0.0
    %169 = vmatpush.msra.mxu0 0.0
    %170 = vmatpush.msra.mxu0 0.0
    %171 = vmatpush.msra.mxu0 0.0
    %172 = vmatpush.msra.mxu0 0.0
    %173 = vmatpush.msra.mxu0 0.0
    %174 = vmatpush.msra.mxu0 0.0
    %v175 = vand.u32 %v32, 4294901760
    %v176 = vsub.f32 %v32, %v175
    %v177 = vand.u32 %v176, 4294901760
    %178 = vmatpush.msra.mxu0 %v177
    %v179 = vand.u32 %v28, 4294901760
    %v180 = vsub.f32 %v28, %v179
    %v181 = vand.u32 %v180, 4294901760
    %182 = vmatpush.msra.mxu0 %v181
    %v183 = vand.u32 %v50, 4294901760
    %184 = vmatmul.f32.gmra.mxu0 %v183
    %v185 = vpop.f32.mrf.mxu0
    %v186 = vadd.f32 %v159, %v185
    %187 = vdwg.mxu0
    %188 = vmatpush.msra.mxu0 0.0
    %189 = vmatpush.msra.mxu0 0.0
    %190 = vmatpush.msra.mxu0 0.0
    %191 = vmatpush.msra.mxu0 0.0
    %192 = vmatpush.msra.mxu0 0.0
    %193 = vmatpush.msra.mxu0 0.0
    %194 = vmatpush.msra.mxu0 0.0
    %195 = vmatpush.msra.mxu0 0.0
    %196 = vmatpush.msra.mxu0 0.0
    %197 = vmatpush.msra.mxu0 0.0
    %198 = vmatpush.msra.mxu0 0.0
    %199 = vmatpush.msra.mxu0 0.0
    %200 = vmatpush.msra.mxu0 0.0
    %201 = vmatpush.msra.mxu0 0.0
    %v202 = vand.u32 %v32, 4294901760
    %203 = vmatpush.msra.mxu0 %v202
    %v204 = vand.u32 %v28, 4294901760
    %205 = vmatpush.msra.mxu0 %v204
    %v206 = vand.u32 %v50, 4294901760
    %207 = vmatmul.f32.gmra.mxu0 %v206
    %v208 = vpop.f32.mrf.mxu0
    %v209 = vadd.f32 %v186, %v208
    %210 = vdwg.mxu0
    %211 = vmatpush.msra.mxu0 0.0
    %212 = vmatpush.msra.mxu0 0.0
    %213 = vmatpush.msra.mxu0 0.0
    %214 = vmatpush.msra.mxu0 0.0
    %215 = vmatpush.msra.mxu0 0.0
    %216 = vmatpush.msra.mxu0 0.0
    %217 = vmatpush.msra.mxu0 0.0
    %218 = vmatpush.msra.mxu0 0.0
    %219 = vmatpush.msra.mxu0 0.0
    %220 = vmatpush.msra.mxu0 0.0
    %221 = vmatpush.msra.mxu0 0.0
    %222 = vmatpush.msra.mxu0 0.0
    %223 = vmatpush.msra.mxu0 0.0
    %224 = vmatpush.msra.mxu0 0.0
    %v225 = vand.u32 %v33, 4294901760
    %226 = vmatpush.msra.mxu0 %v225
    %v227 = vand.u32 %v29, 4294901760
    %228 = vmatpush.msra.mxu0 %v227
    %v229 = vand.u32 %v50, 4294901760
    %v230 = vsub.f32 %v50, %v229
    %v231 = vand.u32 %v230, 4294901760
    %v232 = vsub.f32 %v230, %v231
    %v233 = vand.u32 %v232, 4294901760
    %234 = vmatmul.f32.gmra.mxu0 %v233
    %v235 = vpop.f32.mrf.mxu0
    %v236 = vadd.f32 %v41, %v235
    %237 = vdwg.mxu0
    %238 = vmatpush.msra.mxu0 0.0
    %239 = vmatpush.msra.mxu0 0.0
    %240 = vmatpush.msra.mxu0 0.0
    %241 = vmatpush.msra.mxu0 0.0
    %242 = vmatpush.msra.mxu0 0.0
    %243 = vmatpush.msra.mxu0 0.0
    %244 = vmatpush.msra.mxu0 0.0
    %245 = vmatpush.msra.mxu0 0.0
    %246 = vmatpush.msra.mxu0 0.0
    %247 = vmatpush.msra.mxu0 0.0
    %248 = vmatpush.msra.mxu0 0.0
    %249 = vmatpush.msra.mxu0 0.0
    %250 = vmatpush.msra.mxu0 0.0
    %251 = vmatpush.msra.mxu0 0.0
    %v252 = vand.u32 %v33, 4294901760
    %v253 = vsub.f32 %v33, %v252
    %v254 = vand.u32 %v253, 4294901760
    %v255 = vsub.f32 %v253, %v254
    %v256 = vand.u32 %v255, 4294901760
    %257 = vmatpush.msra.mxu0 %v256
    %v258 = vand.u32 %v29, 4294901760
    %v259 = vsub.f32 %v29, %v258
    %v260 = vand.u32 %v259, 4294901760
    %v261 = vsub.f32 %v259, %v260
    %v262 = vand.u32 %v261, 4294901760
    %263 = vmatpush.msra.mxu0 %v262
    %v264 = vand.u32 %v50, 4294901760
    %265 = vmatmul.f32.gmra.mxu0 %v264
    %v266 = vpop.f32.mrf.mxu0
    %v267 = vadd.f32 %v236, %v266
    %268 = vdwg.mxu0
    %269 = vmatpush.msra.mxu0 0.0
    %270 = vmatpush.msra.mxu0 0.0
    %271 = vmatpush.msra.mxu0 0.0
    %272 = vmatpush.msra.mxu0 0.0
    %273 = vmatpush.msra.mxu0 0.0
    %274 = vmatpush.msra.mxu0 0.0
    %275 = vmatpush.msra.mxu0 0.0
    %276 = vmatpush.msra.mxu0 0.0
    %277 = vmatpush.msra.mxu0 0.0
    %278 = vmatpush.msra.mxu0 0.0
    %279 = vmatpush.msra.mxu0 0.0
    %280 = vmatpush.msra.mxu0 0.0
    %281 = vmatpush.msra.mxu0 0.0
    %282 = vmatpush.msra.mxu0 0.0
    %v283 = vand.u32 %v33, 4294901760
    %v284 = vsub.f32 %v33, %v283
    %285 = vmatpush.msra.mxu0 %v284
    %v286 = vand.u32 %v29, 4294901760
    %v287 = vsub.f32 %v29, %v286
    %288 = vmatpush.msra.mxu0 %v287
    %v289 = vand.u32 %v50, 4294901760
    %v290 = vsub.f32 %v50, %v289
    %291 = vmatmul.f32.gmra.mxu0 %v290
    %v292 = vpop.f32.mrf.mxu0
    %v293 = vadd.f32 %v267, %v292
    %294 = vdwg.mxu0
    %295 = vmatpush.msra.mxu0 0.0
    %296 = vmatpush.msra.mxu0 0.0
    %297 = vmatpush.msra.mxu0 0.0
    %298 = vmatpush.msra.mxu0 0.0
    %299 = vmatpush.msra.mxu0 0.0
    %300 = vmatpush.msra.mxu0 0.0
    %301 = vmatpush.msra.mxu0 0.0
    %302 = vmatpush.msra.mxu0 0.0
    %303 = vmatpush.msra.mxu0 0.0
    %304 = vmatpush.msra.mxu0 0.0
    %305 = vmatpush.msra.mxu0 0.0
    %306 = vmatpush.msra.mxu0 0.0
    %307 = vmatpush.msra.mxu0 0.0
    %308 = vmatpush.msra.mxu0 0.0
    %v309 = vand.u32 %v33, 4294901760
    %310 = vmatpush.msra.mxu0 %v309
    %v311 = vand.u32 %v29, 4294901760
    %312 = vmatpush.msra.mxu0 %v311
    %v313 = vand.u32 %v50, 4294901760
    %v314 = vsub.f32 %v50, %v313
    %v315 = vand.u32 %v314, 4294901760
    %316 = vmatmul.f32.gmra.mxu0 %v315
    %v317 = vpop.f32.mrf.mxu0
    %v318 = vadd.f32 %v293, %v317
    %319 = vdwg.mxu0
    %320 = vmatpush.msra.mxu0 0.0
    %321 = vmatpush.msra.mxu0 0.0
    %322 = vmatpush.msra.mxu0 0.0
    %323 = vmatpush.msra.mxu0 0.0
    %324 = vmatpush.msra.mxu0 0.0
    %325 = vmatpush.msra.mxu0 0.0
    %326 = vmatpush.msra.mxu0 0.0
    %327 = vmatpush.msra.mxu0 0.0
    %328 = vmatpush.msra.mxu0 0.0
    %329 = vmatpush.msra.mxu0 0.0
    %330 = vmatpush.msra.mxu0 0.0
    %331 = vmatpush.msra.mxu0 0.0
    %332 = vmatpush.msra.mxu0 0.0
    %333 = vmatpush.msra.mxu0 0.0
    %v334 = vand.u32 %v33, 4294901760
    %v335 = vsub.f32 %v33, %v334
    %v336 = vand.u32 %v335, 4294901760
    %337 = vmatpush.msra.mxu0 %v336
    %v338 = vand.u32 %v29, 4294901760
    %v339 = vsub.f32 %v29, %v338
    %v340 = vand.u32 %v339, 4294901760
    %341 = vmatpush.msra.mxu0 %v340
    %v342 = vand.u32 %v50, 4294901760
    %343 = vmatmul.f32.gmra.mxu0 %v342
    %v344 = vpop.f32.mrf.mxu0
    %v345 = vadd.f32 %v318, %v344
    %346 = vdwg.mxu0
    %347 = vmatpush.msra.mxu0 0.0
    %348 = vmatpush.msra.mxu0 0.0
    %349 = vmatpush.msra.mxu0 0.0
    %350 = vmatpush.msra.mxu0 0.0
    %351 = vmatpush.msra.mxu0 0.0
    %352 = vmatpush.msra.mxu0 0.0
    %353 = vmatpush.msra.mxu0 0.0
    %354 = vmatpush.msra.mxu0 0.0
    %355 = vmatpush.msra.mxu0 0.0
    %356 = vmatpush.msra.mxu0 0.0
    %357 = vmatpush.msra.mxu0 0.0
    %358 = vmatpush.msra.mxu0 0.0
    %359 = vmatpush.msra.mxu0 0.0
    %360 = vmatpush.msra.mxu0 0.0
    %v361 = vand.u32 %v33, 4294901760
    %362 = vmatpush.msra.mxu0 %v361
    %v363 = vand.u32 %v29, 4294901760
    %364 = vmatpush.msra.mxu0 %v363
    %v365 = vand.u32 %v50, 4294901760
    %366 = vmatmul.f32.gmra.mxu0 %v365
    %v367 = vpop.f32.mrf.mxu0
    %v368 = vadd.f32 %v345, %v367
    %369 = vdwg.mxu0
    %370 = vmatpush.msra.mxu0 0.0
    %371 = vmatpush.msra.mxu0 0.0
    %372 = vmatpush.msra.mxu0 0.0
    %373 = vmatpush.msra.mxu0 0.0
    %374 = vmatpush.msra.mxu0 0.0
    %375 = vmatpush.msra.mxu0 0.0
    %376 = vmatpush.msra.mxu0 0.0
    %377 = vmatpush.msra.mxu0 0.0
    %378 = vmatpush.msra.mxu0 0.0
    %379 = vmatpush.msra.mxu0 0.0
    %380 = vmatpush.msra.mxu0 0.0
    %381 = vmatpush.msra.mxu0 0.0
    %382 = vmatpush.msra.mxu0 0.0
    %383 = vmatpush.msra.mxu0 0.0
    %v384 = vand.u32 %v34, 4294901760
    %385 = vmatpush.msra.mxu0 %v384
    %v386 = vand.u32 %v30, 4294901760
    %387 = vmatpush.msra.mxu0 %v386
    %v388 = vand.u32 %v50, 4294901760
    %v389 = vsub.f32 %v50, %v388
    %v390 = vand.u32 %v389, 4294901760
    %v391 = vsub.f32 %v389, %v390
    %v392 = vand.u32 %v391, 4294901760
    %393 = vmatmul.f32.gmra.mxu0 %v392
    %v394 = vpop.f32.mrf.mxu0
    %v395 = vadd.f32 %v42, %v394
    %396 = vdwg.mxu0
    %397 = vmatpush.msra.mxu0 0.0
    %398 = vmatpush.msra.mxu0 0.0
    %399 = vmatpush.msra.mxu0 0.0
    %400 = vmatpush.msra.mxu0 0.0
    %401 = vmatpush.msra.mxu0 0.0
    %402 = vmatpush.msra.mxu0 0.0
    %403 = vmatpush.msra.mxu0 0.0
    %404 = vmatpush.msra.mxu0 0.0
    %405 = vmatpush.msra.mxu0 0.0
    %406 = vmatpush.msra.mxu0 0.0
    %407 = vmatpush.msra.mxu0 0.0
    %408 = vmatpush.msra.mxu0 0.0
    %409 = vmatpush.msra.mxu0 0.0
    %410 = vmatpush.msra.mxu0 0.0
    %v411 = vand.u32 %v34, 4294901760
    %v412 = vsub.f32 %v34, %v411
    %v413 = vand.u32 %v412, 4294901760
    %v414 = vsub.f32 %v412, %v413
    %v415 = vand.u32 %v414, 4294901760
    %416 = vmatpush.msra.mxu0 %v415
    %v417 = vand.u32 %v30, 4294901760
    %v418 = vsub.f32 %v30, %v417
    %v419 = vand.u32 %v418, 4294901760
    %v420 = vsub.f32 %v418, %v419
    %v421 = vand.u32 %v420, 4294901760
    %422 = vmatpush.msra.mxu0 %v421
    %v423 = vand.u32 %v50, 4294901760
    %424 = vmatmul.f32.gmra.mxu0 %v423
    %v425 = vpop.f32.mrf.mxu0
    %v426 = vadd.f32 %v395, %v425
    %427 = vdwg.mxu0
    %428 = vmatpush.msra.mxu0 0.0
    %429 = vmatpush.msra.mxu0 0.0
    %430 = vmatpush.msra.mxu0 0.0
    %431 = vmatpush.msra.mxu0 0.0
    %432 = vmatpush.msra.mxu0 0.0
    %433 = vmatpush.msra.mxu0 0.0
    %434 = vmatpush.msra.mxu0 0.0
    %435 = vmatpush.msra.mxu0 0.0
    %436 = vmatpush.msra.mxu0 0.0
    %437 = vmatpush.msra.mxu0 0.0
    %438 = vmatpush.msra.mxu0 0.0
    %439 = vmatpush.msra.mxu0 0.0
    %440 = vmatpush.msra.mxu0 0.0
    %441 = vmatpush.msra.mxu0 0.0
    %v442 = vand.u32 %v34, 4294901760
    %v443 = vsub.f32 %v34, %v442
    %444 = vmatpush.msra.mxu0 %v443
    %v445 = vand.u32 %v30, 4294901760
    %v446 = vsub.f32 %v30, %v445
    %447 = vmatpush.msra.mxu0 %v446
    %v448 = vand.u32 %v50, 4294901760
    %v449 = vsub.f32 %v50, %v448
    %450 = vmatmul.f32.gmra.mxu0 %v449
    %v451 = vpop.f32.mrf.mxu0
    %v452 = vadd.f32 %v426, %v451
    %453 = vdwg.mxu0
    %454 = vmatpush.msra.mxu0 0.0
    %455 = vmatpush.msra.mxu0 0.0
    %456 = vmatpush.msra.mxu0 0.0
    %457 = vmatpush.msra.mxu0 0.0
    %458 = vmatpush.msra.mxu0 0.0
    %459 = vmatpush.msra.mxu0 0.0
    %460 = vmatpush.msra.mxu0 0.0
    %461 = vmatpush.msra.mxu0 0.0
    %462 = vmatpush.msra.mxu0 0.0
    %463 = vmatpush.msra.mxu0 0.0
    %464 = vmatpush.msra.mxu0 0.0
    %465 = vmatpush.msra.mxu0 0.0
    %466 = vmatpush.msra.mxu0 0.0
    %467 = vmatpush.msra.mxu0 0.0
    %v468 = vand.u32 %v34, 4294901760
    %469 = vmatpush.msra.mxu0 %v468
    %v470 = vand.u32 %v30, 4294901760
    %471 = vmatpush.msra.mxu0 %v470
    %v472 = vand.u32 %v50, 4294901760
    %v473 = vsub.f32 %v50, %v472
    %v474 = vand.u32 %v473, 4294901760
    %475 = vmatmul.f32.gmra.mxu0 %v474
    %v476 = vpop.f32.mrf.mxu0
    %v477 = vadd.f32 %v452, %v476
    %478 = vdwg.mxu0
    %479 = vmatpush.msra.mxu0 0.0
    %480 = vmatpush.msra.mxu0 0.0
    %481 = vmatpush.msra.mxu0 0.0
    %482 = vmatpush.msra.mxu0 0.0
    %483 = vmatpush.msra.mxu0 0.0
    %484 = vmatpush.msra.mxu0 0.0
    %485 = vmatpush.msra.mxu0 0.0
    %486 = vmatpush.msra.mxu0 0.0
    %487 = vmatpush.msra.mxu0 0.0
    %488 = vmatpush.msra.mxu0 0.0
    %489 = vmatpush.msra.mxu0 0.0
    %490 = vmatpush.msra.mxu0 0.0
    %491 = vmatpush.msra.mxu0 0.0
    %492 = vmatpush.msra.mxu0 0.0
    %v493 = vand.u32 %v34, 4294901760
    %v494 = vsub.f32 %v34, %v493
    %v495 = vand.u32 %v494, 4294901760
    %496 = vmatpush.msra.mxu0 %v495
    %v497 = vand.u32 %v30, 4294901760
    %v498 = vsub.f32 %v30, %v497
    %v499 = vand.u32 %v498, 4294901760
    %500 = vmatpush.msra.mxu0 %v499
    %v501 = vand.u32 %v50, 4294901760
    %502 = vmatmul.f32.gmra.mxu0 %v501
    %v503 = vpop.f32.mrf.mxu0
    %v504 = vadd.f32 %v477, %v503
    %505 = vdwg.mxu0
    %506 = vmatpush.msra.mxu0 0.0
    %507 = vmatpush.msra.mxu0 0.0
    %508 = vmatpush.msra.mxu0 0.0
    %509 = vmatpush.msra.mxu0 0.0
    %510 = vmatpush.msra.mxu0 0.0
    %511 = vmatpush.msra.mxu0 0.0
    %512 = vmatpush.msra.mxu0 0.0
    %513 = vmatpush.msra.mxu0 0.0
    %514 = vmatpush.msra.mxu0 0.0
    %515 = vmatpush.msra.mxu0 0.0
    %516 = vmatpush.msra.mxu0 0.0
    %517 = vmatpush.msra.mxu0 0.0
    %518 = vmatpush.msra.mxu0 0.0
    %519 = vmatpush.msra.mxu0 0.0
    %v520 = vand.u32 %v34, 4294901760
    %521 = vmatpush.msra.mxu0 %v520
    %v522 = vand.u32 %v30, 4294901760
    %523 = vmatpush.msra.mxu0 %v522
    %v524 = vand.u32 %v50, 4294901760
    %525 = vmatmul.f32.gmra.mxu0 %v524
    %v526 = vpop.f32.mrf.mxu0
    %v527 = vadd.f32 %v504, %v526
    %528 = vdwg.mxu0
    %529 = vmatpush.msra.mxu0 0.0
    %530 = vmatpush.msra.mxu0 0.0
    %531 = vmatpush.msra.mxu0 0.0
    %532 = vmatpush.msra.mxu0 0.0
    %533 = vmatpush.msra.mxu0 0.0
    %534 = vmatpush.msra.mxu0 0.0
    %535 = vmatpush.msra.mxu0 0.0
    %536 = vmatpush.msra.mxu0 0.0
    %537 = vmatpush.msra.mxu0 0.0
    %538 = vmatpush.msra.mxu0 0.0
    %539 = vmatpush.msra.mxu0 0.0
    %540 = vmatpush.msra.mxu0 0.0
    %541 = vmatpush.msra.mxu0 0.0
    %542 = vmatpush.msra.mxu0 0.0
    %v543 = vand.u32 %v35, 4294901760
    %544 = vmatpush.msra.mxu0 %v543
    %v545 = vand.u32 %v31, 4294901760
    %546 = vmatpush.msra.mxu0 %v545
    %v547 = vand.u32 %v50, 4294901760
    %v548 = vsub.f32 %v50, %v547
    %v549 = vand.u32 %v548, 4294901760
    %v550 = vsub.f32 %v548, %v549
    %v551 = vand.u32 %v550, 4294901760
    %552 = vmatmul.f32.gmra.mxu0 %v551
    %v553 = vpop.f32.mrf.mxu0
    %v554 = vadd.f32 %v43, %v553
    %555 = vdwg.mxu0
    %556 = vmatpush.msra.mxu0 0.0
    %557 = vmatpush.msra.mxu0 0.0
    %558 = vmatpush.msra.mxu0 0.0
    %559 = vmatpush.msra.mxu0 0.0
    %560 = vmatpush.msra.mxu0 0.0
    %561 = vmatpush.msra.mxu0 0.0
    %562 = vmatpush.msra.mxu0 0.0
    %563 = vmatpush.msra.mxu0 0.0
    %564 = vmatpush.msra.mxu0 0.0
    %565 = vmatpush.msra.mxu0 0.0
    %566 = vmatpush.msra.mxu0 0.0
    %567 = vmatpush.msra.mxu0 0.0
    %568 = vmatpush.msra.mxu0 0.0
    %569 = vmatpush.msra.mxu0 0.0
    %v570 = vand.u32 %v35, 4294901760
    %v571 = vsub.f32 %v35, %v570
    %v572 = vand.u32 %v571, 4294901760
    %v573 = vsub.f32 %v571, %v572
    %v574 = vand.u32 %v573, 4294901760
    %575 = vmatpush.msra.mxu0 %v574
    %v576 = vand.u32 %v31, 4294901760
    %v577 = vsub.f32 %v31, %v576
    %v578 = vand.u32 %v577, 4294901760
    %v579 = vsub.f32 %v577, %v578
    %v580 = vand.u32 %v579, 4294901760
    %581 = vmatpush.msra.mxu0 %v580
    %v582 = vand.u32 %v50, 4294901760
    %583 = vmatmul.f32.gmra.mxu0 %v582
    %v584 = vpop.f32.mrf.mxu0
    %v585 = vadd.f32 %v554, %v584
    %586 = vdwg.mxu0
    %587 = vmatpush.msra.mxu0 0.0
    %588 = vmatpush.msra.mxu0 0.0
    %589 = vmatpush.msra.mxu0 0.0
    %590 = vmatpush.msra.mxu0 0.0
    %591 = vmatpush.msra.mxu0 0.0
    %592 = vmatpush.msra.mxu0 0.0
    %593 = vmatpush.msra.mxu0 0.0
    %594 = vmatpush.msra.mxu0 0.0
    %595 = vmatpush.msra.mxu0 0.0
    %596 = vmatpush.msra.mxu0 0.0
    %597 = vmatpush.msra.mxu0 0.0
    %598 = vmatpush.msra.mxu0 0.0
    %599 = vmatpush.msra.mxu0 0.0
    %600 = vmatpush.msra.mxu0 0.0
    %v601 = vand.u32 %v35, 4294901760
    %v602 = vsub.f32 %v35, %v601
    %603 = vmatpush.msra.mxu0 %v602
    %v604 = vand.u32 %v31, 4294901760
    %v605 = vsub.f32 %v31, %v604
    %606 = vmatpush.msra.mxu0 %v605
    %v607 = vand.u32 %v50, 4294901760
    %v608 = vsub.f32 %v50, %v607
    %609 = vmatmul.f32.gmra.mxu0 %v608
    %v610 = vpop.f32.mrf.mxu0
    %v611 = vadd.f32 %v585, %v610
    %612 = vdwg.mxu0
    %613 = vmatpush.msra.mxu0 0.0
    %614 = vmatpush.msra.mxu0 0.0
    %615 = vmatpush.msra.mxu0 0.0
    %616 = vmatpush.msra.mxu0 0.0
    %617 = vmatpush.msra.mxu0 0.0
    %618 = vmatpush.msra.mxu0 0.0
    %619 = vmatpush.msra.mxu0 0.0
    %620 = vmatpush.msra.mxu0 0.0
    %621 = vmatpush.msra.mxu0 0.0
    %622 = vmatpush.msra.mxu0 0.0
    %623 = vmatpush.msra.mxu0 0.0
    %624 = vmatpush.msra.mxu0 0.0
    %625 = vmatpush.msra.mxu0 0.0
    %626 = vmatpush.msra.mxu0 0.0
    %v627 = vand.u32 %v35, 4294901760
    %628 = vmatpush.msra.mxu0 %v627
    %v629 = vand.u32 %v31, 4294901760
    %630 = vmatpush.msra.mxu0 %v629
    %v631 = vand.u32 %v50, 4294901760
    %v632 = vsub.f32 %v50, %v631
    %v633 = vand.u32 %v632, 4294901760
    %634 = vmatmul.f32.gmra.mxu0 %v633
    %v635 = vpop.f32.mrf.mxu0
    %v636 = vadd.f32 %v611, %v635
    %637 = vdwg.mxu0
    %638 = vmatpush.msra.mxu0 0.0
    %639 = vmatpush.msra.mxu0 0.0
    %640 = vmatpush.msra.mxu0 0.0
    %641 = vmatpush.msra.mxu0 0.0
    %642 = vmatpush.msra.mxu0 0.0
    %643 = vmatpush.msra.mxu0 0.0
    %644 = vmatpush.msra.mxu0 0.0
    %645 = vmatpush.msra.mxu0 0.0
    %646 = vmatpush.msra.mxu0 0.0
    %647 = vmatpush.msra.mxu0 0.0
    %648 = vmatpush.msra.mxu0 0.0
    %649 = vmatpush.msra.mxu0 0.0
    %650 = vmatpush.msra.mxu0 0.0
    %651 = vmatpush.msra.mxu0 0.0
    %v652 = vand.u32 %v35, 4294901760
    %v653 = vsub.f32 %v35, %v652
    %v654 = vand.u32 %v653, 4294901760
    %655 = vmatpush.msra.mxu0 %v654
    %v656 = vand.u32 %v31, 4294901760
    %v657 = vsub.f32 %v31, %v656
    %v658 = vand.u32 %v657, 4294901760
    %659 = vmatpush.msra.mxu0 %v658
    %v660 = vand.u32 %v50, 4294901760
    %661 = vmatmul.f32.gmra.mxu0 %v660
    %v662 = vpop.f32.mrf.mxu0
    %v663 = vadd.f32 %v636, %v662
    %664 = vdwg.mxu0
    %665 = vmatpush.msra.mxu0 0.0
    %666 = vmatpush.msra.mxu0 0.0
    %667 = vmatpush.msra.mxu0 0.0
    %668 = vmatpush.msra.mxu0 0.0
    %669 = vmatpush.msra.mxu0 0.0
    %670 = vmatpush.msra.mxu0 0.0
    %671 = vmatpush.msra.mxu0 0.0
    %672 = vmatpush.msra.mxu0 0.0
    %673 = vmatpush.msra.mxu0 0.0
    %674 = vmatpush.msra.mxu0 0.0
    %675 = vmatpush.msra.mxu0 0.0
    %676 = vmatpush.msra.mxu0 0.0
    %677 = vmatpush.msra.mxu0 0.0
    %678 = vmatpush.msra.mxu0 0.0
    %v679 = vand.u32 %v35, 4294901760
    %680 = vmatpush.msra.mxu0 %v679
    %v681 = vand.u32 %v31, 4294901760
    %682 = vmatpush.msra.mxu0 %v681
    %v683 = vand.u32 %v50, 4294901760
    %684 = vmatmul.f32.gmra.mxu0 %v683
    %v685 = vpop.f32.mrf.mxu0
    %v686 = vadd.f32 %v663, %v685
    %687 = vdwg.mxu0
    %v692 = vrot.slane %v368, 4
    %v693 = vrot.slane %v686, 4
    %vm694 = vcmask 1043456
    %v695 = vsel %vm694, %v209, %v692
    %v696 = vsel %vm694, %v527, %v693
    %699 = vst [vmem:[#allocation5] sm:$0xff] %v695
    %700 = vst [vmem:[#allocation5 + $0x8] sm:$0xff] %v696
    // Predicated region
    $region14: #{_qellm_pallas.3} parent=1 // pred_check
      _
    $region15: #{_qellm_pallas.3} parent=1 // pred_check_branch
      %702 = sbr.rel (0) target = $region17
    $region16: #{_qellm_pallas.3} parent=1 // pred_region
      %704 = vsyncadd [#allocation4], 0
      %s706 = sshll.u32 [#allocation5], 4
      %s707 = int_to_ptr.vmem [resolvable:$true] %s706
      %s708 = sshll.u32 %s2, 4
      %s709 = int_to_ptr.hbm [resolvable:$true] %s708
      %711 = dma.vmem_to_hbm [thread:$0]  %s707, 256, %s709, [#allocation4]
    $region17: #{_qellm_pallas.3} parent=1 // pred_fallthru
      _
    // Predicated region
    $region18: #{_qellm_pallas.3} parent=1 // pred_check
      _
    $region19: #{_qellm_pallas.3} parent=1 // pred_check_branch
      %713 = sbr.rel (0) target = $region21
    $region20: #{_qellm_pallas.3} parent=1 // pred_region
      %715 = dma.done [#allocation4], 256
    $region21: #{_qellm_pallas.3} parent=1 // pred_fallthru
      _
    %716 = vsyncpa [#allocation3], 1
    %717 = vsyncpa [#allocation4], 1

// kernel: _qellm_pallas.2
$region0: #{_qellm_pallas.2}
  #allocation0 [shape = 'u32[]', space=smem, size = 0x4, offset = 0x4, fixed_abs, tag = 'smem constant byte address 0x4 - core index']
  #allocation1 [shape = 'u32[72,128]{1,0:T(1,128)}', space=vmem, size = 0x9000, scoped, tag = 'internal scratch']
  %s0 = inlined_call_operand.vmem [shape: f32[4,4], index: 0, kind: input, shape index: {}]
  %s1 = inlined_call_operand.vmem [shape: f32[3,4,4,4], index: 1, kind: input, shape index: {}]
  %s2 = inlined_call_operand.vmem [shape: f32[40,32], index: 2, kind: input, shape index: {}]
  %s3 = inlined_call_operand.vmem [shape: f32[4,16], index: 3, kind: output, shape index: {}]
  %s4 = sld [smem:[#allocation0]]
  $region22: #{_qellm_pallas.2} parent=0
    _
  %s6 = ssub.s32 1, %s4
  %s7 = scalar_select 0, %s6, %s4
  // Predicated region
  $region2: #{_qellm_pallas.2} parent=0 // pred_check
    _
  $region3: #{_qellm_pallas.2} parent=0 // pred_check_branch
    %9 = sbr.rel (0) target = $region5
  $region4: #{_qellm_pallas.2} parent=0 // pred_region
    _
  $region5: #{_qellm_pallas.2} parent=0 // pred_fallthru
    _
  // Predicated region
  $region6: #{_qellm_pallas.2} parent=0 // pred_check
    _
  $region7: #{_qellm_pallas.2} parent=0 // pred_check_branch
    %11 = sbr.rel (0) target = $region9
  $region8: #{_qellm_pallas.2} parent=0 // pred_region
    _
  $region9: #{_qellm_pallas.2} parent=0 // pred_fallthru
    _
  // Predicated region
  $region10: #{_qellm_pallas.2} parent=0 // pred_check
    _
  $region11: #{_qellm_pallas.2} parent=0 // pred_check_branch
    %13 = sbr.rel (0) target = $region13
  $region12: #{_qellm_pallas.2} parent=0 // pred_region
    _
  $region13: #{_qellm_pallas.2} parent=0 // pred_fallthru
    _
  %v14 = vld [vmem:[%s0] sm:$0xf]
  %v15 = vld [vmem:[%s1] sm:$0xf]
  %v16 = vld [vmem:[%s1 + $0x4] sm:$0xf]
  %v17 = vld [vmem:[%s1 + $0x8] sm:$0xf]
  %v18 = vld [vmem:[%s1 + $0xc] sm:$0xf]
  %v20 = vrot.slane %v14, 1
  %v21 = vrot.slane %v14, 2
  %v22 = vrot.slane %v14, 3
  %v23 = vperm.slane %v14, 0
  %v24 = vperm.slane %v20, 0
  %v25 = vperm.slane %v21, 0
  %v26 = vperm.slane %v22, 0
  %v31 = vmul.f32 %v15, %v23
  %v32 = vmul.f32 %v16, %v24
  %v33 = vmul.f32 %v17, %v25
  %v34 = vmul.f32 %v18, %v26
  %vm35 = vcmask 27648
  %v36 = vsel %vm35, %v31, 0.0
  %37 = vadd.xlane.f32.xlu0 %v36
  %v38 = vpop.xlane.xlu0 %37
  %v39 = vsel %vm35, %v32, 0.0
  %40 = vadd.xlane.f32.xlu0 %v39
  %v41 = vpop.xlane.xlu0 %40
  %v42 = vsel %vm35, %v33, 0.0
  %43 = vadd.xlane.f32.xlu0 %v42
  %v44 = vpop.xlane.xlu0 %43
  %v45 = vsel %vm35, %v34, 0.0
  %46 = vadd.xlane.f32.xlu0 %v45
  %v47 = vpop.xlane.xlu0 %46
  %s48 = scalar_lea.vmem %s1, 16
  %v49 = vld [vmem:[%s48] sm:$0xf]
  %v50 = vld [vmem:[%s48 + $0x4] sm:$0xf]
  %v51 = vld [vmem:[%s48 + $0x8] sm:$0xf]
  %v52 = vld [vmem:[%s48 + $0xc] sm:$0xf]
  %v57 = vlaneseq
  %v58 = vand.u32 %v57, 127
  %v59 = vperm.slane %v38, %v58
  %v60 = vperm.slane %v41, %v58
  %v61 = vperm.slane %v44, %v58
  %v62 = vperm.slane %v47, %v58
  %vm63 = vcmask 1041409
  %vm64 = vcmask 1042434
  %v65 = vsel %vm64, %v59, %v59
  %vm66 = vcmask 1043459
  %v67 = vsel %vm66, %v59, %v65
  %v68 = vsel %vm64, %v60, %v60
  %v69 = vsel %vm66, %v60, %v68
  %v70 = vsel %vm64, %v61, %v61
  %v71 = vsel %vm66, %v61, %v70
  %v72 = vsel %vm64, %v62, %v62
  %v73 = vsel %vm66, %v62, %v72
  %v78 = vmul.f32 %v49, %v67
  %v79 = vmul.f32 %v50, %v69
  %v80 = vmul.f32 %v51, %v71
  %v81 = vmul.f32 %v52, %v73
  %v82 = vsel %vm35, %v78, 0.0
  %83 = vadd.xlane.f32.xlu0 %v82
  %v84 = vpop.xlane.xlu0 %83
  %v85 = vsel %vm35, %v79, 0.0
  %86 = vadd.xlane.f32.xlu0 %v85
  %v87 = vpop.xlane.xlu0 %86
  %v88 = vsel %vm35, %v80, 0.0
  %89 = vadd.xlane.f32.xlu0 %v88
  %v90 = vpop.xlane.xlu0 %89
  %v91 = vsel %vm35, %v81, 0.0
  %92 = vadd.xlane.f32.xlu0 %v91
  %v93 = vpop.xlane.xlu0 %92
  %s94 = scalar_lea.vmem %s1, 32
  %v95 = vld [vmem:[%s94] sm:$0xf]
  %v96 = vld [vmem:[%s94 + $0x4] sm:$0xf]
  %v97 = vld [vmem:[%s94 + $0x8] sm:$0xf]
  %v98 = vld [vmem:[%s94 + $0xc] sm:$0xf]
  %v103 = vperm.slane %v84, %v58
  %v104 = vperm.slane %v87, %v58
  %v105 = vperm.slane %v90, %v58
  %v106 = vperm.slane %v93, %v58
  %v107 = vsel %vm64, %v103, %v103
  %v108 = vsel %vm66, %v103, %v107
  %v109 = vsel %vm64, %v104, %v104
  %v110 = vsel %vm66, %v104, %v109
  %v111 = vsel %vm64, %v105, %v105
  %v112 = vsel %vm66, %v105, %v111
  %v113 = vsel %vm64, %v106, %v106
  %v114 = vsel %vm66, %v106, %v113
  %v119 = vmul.f32 %v95, %v108
  %v120 = vmul.f32 %v96, %v110
  %v121 = vmul.f32 %v97, %v112
  %v122 = vmul.f32 %v98, %v114
  %v123 = vsel %vm35, %v119, 0.0
  %124 = vadd.xlane.f32.xlu0 %v123
  %v125 = vpop.xlane.xlu0 %124
  %v126 = vsel %vm35, %v120, 0.0
  %127 = vadd.xlane.f32.xlu0 %v126
  %v128 = vpop.xlane.xlu0 %127
  %v129 = vsel %vm35, %v121, 0.0
  %130 = vadd.xlane.f32.xlu0 %v129
  %v131 = vpop.xlane.xlu0 %130
  %v132 = vsel %vm35, %v122, 0.0
  %133 = vadd.xlane.f32.xlu0 %v132
  %v134 = vpop.xlane.xlu0 %133
  %v135 = vmul.f32 %v125, 0.5
  %v136 = vmul.f32 %v128, 0.5
  %v137 = vmul.f32 %v131, 0.5
  %v138 = vmul.f32 %v134, 0.5
  %v139 = vand.u32 2147483647, %v135
  %vm140 = vcmp.le.f32.partialorder %v139, 0.7853982
  %vm141 = vcmp.lt.s32.totalorder %v135, 0
  %v142 = vand.u32 %v135, 2139095040
  %v143 = vshrl.u32 %v142, 23
  %v144 = vsub.s32 %v143, 127
  %v145 = vand.u32 2147483647, %v135
  %v146 = vand.u32 %v145, 8388607
  %v147 = vor.u32 %v146, 8388608
  %v148 = vsub.s32 0, %v147
  %v149 = vadd.s32 %v144, 1
  %vm150 = vcmp.gt.s32.totalorder %v149, 0
  %v151 = vsel %vm150, %v149, 0
  %v152 = vshrl.u32 %v151, 5
  %v153 = vand.u32 %v151, 31
  %v154 = vsub.s32 32, %v153
  %v155 = vshrl.u32 683565275, %v154
  %v156 = vshll.u32 683565275, %v153
  %v157 = vshrl.u32 2475754826, %v154
  %v158 = vor.u32 %v156, %v157
  %v159 = vshll.u32 2475754826, %v153
  %v160 = vshrl.u32 2131351028, %v154
  %v161 = vor.u32 %v159, %v160
  %v162 = vshll.u32 2131351028, %v153
  %v163 = vshrl.u32 2102212464, %v154
  %v164 = vor.u32 %v162, %v163
  %v165 = vshll.u32 2102212464, %v153
  %v166 = vshrl.u32 920167782, %v154
  %v167 = vor.u32 %v165, %v166
  %v168 = vshll.u32 920167782, %v153
  %v169 = vshrl.u32 1326507024, %v154
  %v170 = vor.u32 %v168, %v169
  %vm171 = vcmp.lt.s32.totalorder %v152, 1
  %vm172 = vcmp.lt.s32.totalorder %v152, 2
  %vm173 = vcmp.lt.s32.totalorder %v152, 3
  %vm174 = vcmp.lt.s32.totalorder %v152, 4
  %v175 = vsel %vm171, %v155, %v158
  %v176 = vsel %vm174, %v164, 2102212464
  %v177 = vsel %vm173, %v161, %v176
  %v178 = vsel %vm172, %v175, %v177
  %v179 = vsel %vm171, %v158, %v161
  %v180 = vsel %vm174, %v167, 920167782
  %v181 = vsel %vm173, %v164, %v180
  %v182 = vsel %vm172, %v179, %v181
  %v183 = vsel %vm171, %v161, %v164
  %v184 = vsel %vm174, %v170, 1326507024
  %v185 = vsel %vm173, %v167, %v184
  %v186 = vsel %vm172, %v183, %v185
  %v187 = vshll.u32 %v147, 8
  %v188 = vand.u32 %v187, 65535
  %v189 = vshrl.u32 %v187, 16
  %v190 = vand.u32 %v186, 65535
  %v191 = vshrl.u32 %v186, 16
  %v192 = vmul.u32 %v188, %v190
  %v193 = vmul.u32 %v188, %v191
  %v194 = vmul.u32 %v189, %v190
  %v195 = vmul.u32 %v189, %v191
  %v196 = vshll.u32 %v193, 16
  %v197 = vshrl.u32 %v193, 16
  %v198 = vshll.u32 %v194, 16
  %v199 = vshrl.u32 %v194, 16
  %vm200 = vc.u32 %v192, %v196
  %v201 = vsel %vm200, 1, 0
  %v202 = vadd.s32 %v192, %v196
  %v203 = vadd.s32 %v195, %v201
  %vm204 = vc.u32 %v202, %v198
  %v205 = vsel %vm204, 1, 0
  %v206 = vadd.s32 %v202, %v198
  %v207 = vadd.s32 %v203, %v205
  %v208 = vadd.s32 %v207, %v197
  %v209 = vadd.s32 %v208, %v199
  %v210 = vand.u32 %v187, 65535
  %v211 = vshrl.u32 %v187, 16
  %v212 = vand.u32 %v182, 65535
  %v213 = vshrl.u32 %v182, 16
  %v214 = vmul.u32 %v210, %v212
  %v215 = vmul.u32 %v210, %v213
  %v216 = vmul.u32 %v211, %v212
  %v217 = vmul.u32 %v211, %v213
  %v218 = vshll.u32 %v215, 16
  %v219 = vshrl.u32 %v215, 16
  %v220 = vshll.u32 %v216, 16
  %v221 = vshrl.u32 %v216, 16
  %vm222 = vc.u32 %v214, %v218
  %v223 = vsel %vm222, 1, 0
  %v224 = vadd.s32 %v214, %v218
  %v225 = vadd.s32 %v217, %v223
  %vm226 = vc.u32 %v224, %v220
  %v227 = vsel %vm226, 1, 0
  %v228 = vadd.s32 %v224, %v220
  %v229 = vadd.s32 %v225, %v227
  %v230 = vadd.s32 %v229, %v219
  %v231 = vadd.s32 %v230, %v221
  %v232 = vmul.u32 %v187, %v178
  %v233 = vadd.s32 %v209, %v228
  %vm234 = vc.u32 %v209, %v228
  %v235 = vadd.s32 %v231, 1
  %v236 = vsel %vm234, %v235, %v231
  %v237 = vadd.s32 %v232, %v236
  %v238 = vadd.s32 %v237, 536870912
  %v239 = vshrl.u32 %v238, 30
  %v240 = vshll.u32 %v239, 30
  %v241 = vsub.s32 %v237, %v240
  %vm242 = vcmp.lt.s32.totalorder %v241, 0
  %v243 = vsub.s32 0, %v241
  %v244 = vsel %vm242, %v243, %v241
  %v245 = vclz %v244
  %v246 = vsub.s32 %v245, 2
  %vm247 = vcmp.gt.s32.totalorder 0, %v246
  %v248 = vsel %vm247, 0, %v246
  %v249 = vsub.s32 32, %v248
  %v250 = vshll.u32 %v241, %v248
  %v251 = vshrl.u32 %v233, %v249
  %v252 = vor.u32 %v250, %v251
  %v253 = vsub.s32 4294967266, %v248
  %v254 = vadd.s32 %v253, 127
  %v255 = vshll.u32 %v254, 23
  %v256 = vor.u32 4788187, %v255
  %v257 = vand.u32 2147483647, %v256
  %v259 = vcvt.s32.f32 %v252
  %v260 = vmul.f32 %v259, %v257
  %v261 = vxor.u32 %v260, 2147483648
  %v262 = vsel %vm141, %v261, %v260
  %v263 = vsub.s32 4, %v239
  %v264 = vsel %vm141, %v263, %v239
  %v265 = vsel %vm140, %v135, %v262
  %v266 = vsel %vm140, 0, %v264
  %v267 = vmul.f32 %v265, %v265
  %v268 = vmul.f32 %v267, -0.001358992
  %v269 = vadd.f32 %v268, 0.041655596
  %v270 = vmul.f32 %v267, %v269
  %v271 = vadd.f32 %v270, -0.4999988
  %v272 = vmul.f32 %v267, %v271
  %v273 = vadd.f32 1.0, %v272
  %v274 = vmul.f32 %v265, %v265
  %v275 = vmul.f32 %v274, -0.00019511016
  %v276 = vadd.f32 %v275, 0.008332121
  %v277 = vmul.f32 %v274, %v276
  %v278 = vadd.f32 %v277, -0.16666654
  %v279 = vmul.f32 %v274, %v278
  %v280 = vadd.f32 %v279, 1.0
  %v281 = vmul.f32 %v280, %v265
  %vm282 = vweird.f32 %v135
  %v283 = vand.u32 %v266, 3
  %vm284 = vcmp.lt.s32.totalorder %v283, 2
  %vm285 = vcmp.eq.s32.totalorder %v283, 0
  %v286 = vxor.u32 %v281, 2147483648
  %v287 = vsel %vm285, %v273, %v286
  %vm288 = vcmp.eq.s32.totalorder %v283, 2
  %v289 = vxor.u32 %v273, 2147483648
  %v290 = vsel %vm288, %v289, %v281
  %v291 = vsel %vm284, %v287, %v290
  %v292 = vsel %vm282, nan, %v291
  %v293 = vand.u32 2147483647, %v136
  %vm294 = vcmp.le.f32.partialorder %v293, 0.7853982
  %vm295 = vcmp.lt.s32.totalorder %v136, 0
  %v296 = vand.u32 %v136, 2139095040
  %v297 = vshrl.u32 %v296, 23
  %v298 = vsub.s32 %v297, 127
  %v299 = vand.u32 2147483647, %v136
  %v300 = vand.u32 %v299, 8388607
  %v301 = vor.u32 %v300, 8388608
  %v302 = vsub.s32 0, %v301
  %v303 = vadd.s32 %v298, 1
  %vm304 = vcmp.gt.s32.totalorder %v303, 0
  %v305 = vsel %vm304, %v303, 0
  %v306 = vshrl.u32 %v305, 5
  %v307 = vand.u32 %v305, 31
  %v308 = vsub.s32 32, %v307
  %v309 = vshrl.u32 683565275, %v308
  %v310 = vshll.u32 683565275, %v307
  %v311 = vshrl.u32 2475754826, %v308
  %v312 = vor.u32 %v310, %v311
  %v313 = vshll.u32 2475754826, %v307
  %v314 = vshrl.u32 2131351028, %v308
  %v315 = vor.u32 %v313, %v314
  %v316 = vshll.u32 2131351028, %v307
  %v317 = vshrl.u32 2102212464, %v308
  %v318 = vor.u32 %v316, %v317
  %v319 = vshll.u32 2102212464, %v307
  %v320 = vshrl.u32 920167782, %v308
  %v321 = vor.u32 %v319, %v320
  %v322 = vshll.u32 920167782, %v307
  %v323 = vshrl.u32 1326507024, %v308
  %v324 = vor.u32 %v322, %v323
  %vm325 = vcmp.lt.s32.totalorder %v306, 1
  %vm326 = vcmp.lt.s32.totalorder %v306, 2
  %vm327 = vcmp.lt.s32.totalorder %v306, 3
  %vm328 = vcmp.lt.s32.totalorder %v306, 4
  %v329 = vsel %vm325, %v309, %v312
  %v330 = vsel %vm328, %v318, 2102212464
  %v331 = vsel %vm327, %v315, %v330
  %v332 = vsel %vm326, %v329, %v331
  %v333 = vsel %vm325, %v312, %v315
  %v334 = vsel %vm328, %v321, 920167782
  %v335 = vsel %vm327, %v318, %v334
  %v336 = vsel %vm326, %v333, %v335
  %v337 = vsel %vm325, %v315, %v318
  %v338 = vsel %vm328, %v324, 1326507024
  %v339 = vsel %vm327, %v321, %v338
  %v340 = vsel %vm326, %v337, %v339
  %v341 = vshll.u32 %v301, 8
  %v342 = vand.u32 %v341, 65535
  %v343 = vshrl.u32 %v341, 16
  %v344 = vand.u32 %v340, 65535
  %v345 = vshrl.u32 %v340, 16
  %v346 = vmul.u32 %v342, %v344
  %v347 = vmul.u32 %v342, %v345
  %v348 = vmul.u32 %v343, %v344
  %v349 = vmul.u32 %v343, %v345
  %v350 = vshll.u32 %v347, 16
  %v351 = vshrl.u32 %v347, 16
  %v352 = vshll.u32 %v348, 16
  %v353 = vshrl.u32 %v348, 16
  %vm354 = vc.u32 %v346, %v350
  %v355 = vsel %vm354, 1, 0
  %v356 = vadd.s32 %v346, %v350
  %v357 = vadd.s32 %v349, %v355
  %vm358 = vc.u32 %v356, %v352
  %v359 = vsel %vm358, 1, 0
  %v360 = vadd.s32 %v356, %v352
  %v361 = vadd.s32 %v357, %v359
  %v362 = vadd.s32 %v361, %v351
  %v363 = vadd.s32 %v362, %v353
  %v364 = vand.u32 %v341, 65535
  %v365 = vshrl.u32 %v341, 16
  %v366 = vand.u32 %v336, 65535
  %v367 = vshrl.u32 %v336, 16
  %v368 = vmul.u32 %v364, %v366
  %v369 = vmul.u32 %v364, %v367
  %v370 = vmul.u32 %v365, %v366
  %v371 = vmul.u32 %v365, %v367
  %v372 = vshll.u32 %v369, 16
  %v373 = vshrl.u32 %v369, 16
  %v374 = vshll.u32 %v370, 16
  %v375 = vshrl.u32 %v370, 16
  %vm376 = vc.u32 %v368, %v372
  %v377 = vsel %vm376, 1, 0
  %v378 = vadd.s32 %v368, %v372
  %v379 = vadd.s32 %v371, %v377
  %vm380 = vc.u32 %v378, %v374
  %v381 = vsel %vm380, 1, 0
  %v382 = vadd.s32 %v378, %v374
  %v383 = vadd.s32 %v379, %v381
  %v384 = vadd.s32 %v383, %v373
  %v385 = vadd.s32 %v384, %v375
  %v386 = vmul.u32 %v341, %v332
  %v387 = vadd.s32 %v363, %v382
  %vm388 = vc.u32 %v363, %v382
  %v389 = vadd.s32 %v385, 1
  %v390 = vsel %vm388, %v389, %v385
  %v391 = vadd.s32 %v386, %v390
  %v392 = vadd.s32 %v391, 536870912
  %v393 = vshrl.u32 %v392, 30
  %v394 = vshll.u32 %v393, 30
  %v395 = vsub.s32 %v391, %v394
  %vm396 = vcmp.lt.s32.totalorder %v395, 0
  %v397 = vsub.s32 0, %v395
  %v398 = vsel %vm396, %v397, %v395
  %v399 = vclz %v398
  %v400 = vsub.s32 %v399, 2
  %vm401 = vcmp.gt.s32.totalorder 0, %v400
  %v402 = vsel %vm401, 0, %v400
  %v403 = vsub.s32 32, %v402
  %v404 = vshll.u32 %v395, %v402
  %v405 = vshrl.u32 %v387, %v403
  %v406 = vor.u32 %v404, %v405
  %v407 = vsub.s32 4294967266, %v402
  %v408 = vadd.s32 %v407, 127
  %v409 = vshll.u32 %v408, 23
  %v410 = vor.u32 4788187, %v409
  %v411 = vand.u32 2147483647, %v410
  %v413 = vcvt.s32.f32 %v406
  %v414 = vmul.f32 %v413, %v411
  %v415 = vxor.u32 %v414, 2147483648
  %v416 = vsel %vm295, %v415, %v414
  %v417 = vsub.s32 4, %v393
  %v418 = vsel %vm295, %v417, %v393
  %v419 = vsel %vm294, %v136, %v416
  %v420 = vsel %vm294, 0, %v418
  %v421 = vmul.f32 %v419, %v419
  %v422 = vmul.f32 %v421, -0.001358992
  %v423 = vadd.f32 %v422, 0.041655596
  %v424 = vmul.f32 %v421, %v423
  %v425 = vadd.f32 %v424, -0.4999988
  %v426 = vmul.f32 %v421, %v425
  %v427 = vadd.f32 1.0, %v426
  %v428 = vmul.f32 %v419, %v419
  %v429 = vmul.f32 %v428, -0.00019511016
  %v430 = vadd.f32 %v429, 0.008332121
  %v431 = vmul.f32 %v428, %v430
  %v432 = vadd.f32 %v431, -0.16666654
  %v433 = vmul.f32 %v428, %v432
  %v434 = vadd.f32 %v433, 1.0
  %v435 = vmul.f32 %v434, %v419
  %vm436 = vweird.f32 %v136
  %v437 = vand.u32 %v420, 3
  %vm438 = vcmp.lt.s32.totalorder %v437, 2
  %vm439 = vcmp.eq.s32.totalorder %v437, 0
  %v440 = vxor.u32 %v435, 2147483648
  %v441 = vsel %vm439, %v427, %v440
  %vm442 = vcmp.eq.s32.totalorder %v437, 2
  %v443 = vxor.u32 %v427, 2147483648
  %v444 = vsel %vm442, %v443, %v435
  %v445 = vsel %vm438, %v441, %v444
  %v446 = vsel %vm436, nan, %v445
  %v447 = vand.u32 2147483647, %v137
  %vm448 = vcmp.le.f32.partialorder %v447, 0.7853982
  %vm449 = vcmp.lt.s32.totalorder %v137, 0
  %v450 = vand.u32 %v137, 2139095040
  %v451 = vshrl.u32 %v450, 23
  %v452 = vsub.s32 %v451, 127
  %v453 = vand.u32 2147483647, %v137
  %v454 = vand.u32 %v453, 8388607
  %v455 = vor.u32 %v454, 8388608
  %v456 = vsub.s32 0, %v455
  %v457 = vadd.s32 %v452, 1
  %vm458 = vcmp.gt.s32.totalorder %v457, 0
  %v459 = vsel %vm458, %v457, 0
  %v460 = vshrl.u32 %v459, 5
  %v461 = vand.u32 %v459, 31
  %v462 = vsub.s32 32, %v461
  %v463 = vshrl.u32 683565275, %v462
  %v464 = vshll.u32 683565275, %v461
  %v465 = vshrl.u32 2475754826, %v462
  %v466 = vor.u32 %v464, %v465
  %v467 = vshll.u32 2475754826, %v461
  %v468 = vshrl.u32 2131351028, %v462
  %v469 = vor.u32 %v467, %v468
  %v470 = vshll.u32 2131351028, %v461
  %v471 = vshrl.u32 2102212464, %v462
  %v472 = vor.u32 %v470, %v471
  %v473 = vshll.u32 2102212464, %v461
  %v474 = vshrl.u32 920167782, %v462
  %v475 = vor.u32 %v473, %v474
  %v476 = vshll.u32 920167782, %v461
  %v477 = vshrl.u32 1326507024, %v462
  %v478 = vor.u32 %v476, %v477
  %vm479 = vcmp.lt.s32.totalorder %v460, 1
  %vm480 = vcmp.lt.s32.totalorder %v460, 2
  %vm481 = vcmp.lt.s32.totalorder %v460, 3
  %vm482 = vcmp.lt.s32.totalorder %v460, 4
  %v483 = vsel %vm479, %v463, %v466
  %v484 = vsel %vm482, %v472, 2102212464
  %v485 = vsel %vm481, %v469, %v484
  %v486 = vsel %vm480, %v483, %v485
  %v487 = vsel %vm479, %v466, %v469
  %v488 = vsel %vm482, %v475, 920167782
  %v489 = vsel %vm481, %v472, %v488
  %v490 = vsel %vm480, %v487, %v489
  %v491 = vsel %vm479, %v469, %v472
  %v492 = vsel %vm482, %v478, 1326507024
  %v493 = vsel %vm481, %v475, %v492
  %v494 = vsel %vm480, %v491, %v493
  %v495 = vshll.u32 %v455, 8
  %v496 = vand.u32 %v495, 65535
  %v497 = vshrl.u32 %v495, 16
  %v498 = vand.u32 %v494, 65535
  %v499 = vshrl.u32 %v494, 16
  %v500 = vmul.u32 %v496, %v498
  %v501 = vmul.u32 %v496, %v499
  %v502 = vmul.u32 %v497, %v498
  %v503 = vmul.u32 %v497, %v499
  %v504 = vshll.u32 %v501, 16
  %v505 = vshrl.u32 %v501, 16
  %v506 = vshll.u32 %v502, 16
  %v507 = vshrl.u32 %v502, 16
  %vm508 = vc.u32 %v500, %v504
  %v509 = vsel %vm508, 1, 0
  %v510 = vadd.s32 %v500, %v504
  %v511 = vadd.s32 %v503, %v509
  %vm512 = vc.u32 %v510, %v506
  %v513 = vsel %vm512, 1, 0
  %v514 = vadd.s32 %v510, %v506
  %v515 = vadd.s32 %v511, %v513
  %v516 = vadd.s32 %v515, %v505
  %v517 = vadd.s32 %v516, %v507
  %v518 = vand.u32 %v495, 65535
  %v519 = vshrl.u32 %v495, 16
  %v520 = vand.u32 %v490, 65535
  %v521 = vshrl.u32 %v490, 16
  %v522 = vmul.u32 %v518, %v520
  %v523 = vmul.u32 %v518, %v521
  %v524 = vmul.u32 %v519, %v520
  %v525 = vmul.u32 %v519, %v521
  %v526 = vshll.u32 %v523, 16
  %v527 = vshrl.u32 %v523, 16
  %v528 = vshll.u32 %v524, 16
  %v529 = vshrl.u32 %v524, 16
  %vm530 = vc.u32 %v522, %v526
  %v531 = vsel %vm530, 1, 0
  %v532 = vadd.s32 %v522, %v526
  %v533 = vadd.s32 %v525, %v531
  %vm534 = vc.u32 %v532, %v528
  %v535 = vsel %vm534, 1, 0
  %v536 = vadd.s32 %v532, %v528
  %v537 = vadd.s32 %v533, %v535
  %v538 = vadd.s32 %v537, %v527
  %v539 = vadd.s32 %v538, %v529
  %v540 = vmul.u32 %v495, %v486
  %v541 = vadd.s32 %v517, %v536
  %vm542 = vc.u32 %v517, %v536
  %v543 = vadd.s32 %v539, 1
  %v544 = vsel %vm542, %v543, %v539
  %v545 = vadd.s32 %v540, %v544
  %v546 = vadd.s32 %v545, 536870912
  %v547 = vshrl.u32 %v546, 30
  %v548 = vshll.u32 %v547, 30
  %v549 = vsub.s32 %v545, %v548
  %vm550 = vcmp.lt.s32.totalorder %v549, 0
  %v551 = vsub.s32 0, %v549
  %v552 = vsel %vm550, %v551, %v549
  %v553 = vclz %v552
  %v554 = vsub.s32 %v553, 2
  %vm555 = vcmp.gt.s32.totalorder 0, %v554
  %v556 = vsel %vm555, 0, %v554
  %v557 = vsub.s32 32, %v556
  %v558 = vshll.u32 %v549, %v556
  %v559 = vshrl.u32 %v541, %v557
  %v560 = vor.u32 %v558, %v559
  %v561 = vsub.s32 4294967266, %v556
  %v562 = vadd.s32 %v561, 127
  %v563 = vshll.u32 %v562, 23
  %v564 = vor.u32 4788187, %v563
  %v565 = vand.u32 2147483647, %v564
  %v567 = vcvt.s32.f32 %v560
  %v568 = vmul.f32 %v567, %v565
  %v569 = vxor.u32 %v568, 2147483648
  %v570 = vsel %vm449, %v569, %v568
  %v571 = vsub.s32 4, %v547
  %v572 = vsel %vm449, %v571, %v547
  %v573 = vsel %vm448, %v137, %v570
  %v574 = vsel %vm448, 0, %v572
  %v575 = vmul.f32 %v573, %v573
  %v576 = vmul.f32 %v575, -0.001358992
  %v577 = vadd.f32 %v576, 0.041655596
  %v578 = vmul.f32 %v575, %v577
  %v579 = vadd.f32 %v578, -0.4999988
  %v580 = vmul.f32 %v575, %v579
  %v581 = vadd.f32 1.0, %v580
  %v582 = vmul.f32 %v573, %v573
  %v583 = vmul.f32 %v582, -0.00019511016
  %v584 = vadd.f32 %v583, 0.008332121
  %v585 = vmul.f32 %v582, %v584
  %v586 = vadd.f32 %v585, -0.16666654
  %v587 = vmul.f32 %v582, %v586
  %v588 = vadd.f32 %v587, 1.0
  %v589 = vmul.f32 %v588, %v573
  %vm590 = vweird.f32 %v137
  %v591 = vand.u32 %v574, 3
  %vm592 = vcmp.lt.s32.totalorder %v591, 2
  %vm593 = vcmp.eq.s32.totalorder %v591, 0
  %v594 = vxor.u32 %v589, 2147483648
  %v595 = vsel %vm593, %v581, %v594
  %vm596 = vcmp.eq.s32.totalorder %v591, 2
  %v597 = vxor.u32 %v581, 2147483648
  %v598 = vsel %vm596, %v597, %v589
  %v599 = vsel %vm592, %v595, %v598
  %v600 = vsel %vm590, nan, %v599
  %v601 = vand.u32 2147483647, %v138
  %vm602 = vcmp.le.f32.partialorder %v601, 0.7853982
  %vm603 = vcmp.lt.s32.totalorder %v138, 0
  %v604 = vand.u32 %v138, 2139095040
  %v605 = vshrl.u32 %v604, 23
  %v606 = vsub.s32 %v605, 127
  %v607 = vand.u32 2147483647, %v138
  %v608 = vand.u32 %v607, 8388607
  %v609 = vor.u32 %v608, 8388608
  %v610 = vsub.s32 0, %v609
  %v611 = vadd.s32 %v606, 1
  %vm612 = vcmp.gt.s32.totalorder %v611, 0
  %v613 = vsel %vm612, %v611, 0
  %v614 = vshrl.u32 %v613, 5
  %v615 = vand.u32 %v613, 31
  %v616 = vsub.s32 32, %v615
  %v617 = vshrl.u32 683565275, %v616
  %v618 = vshll.u32 683565275, %v615
  %v619 = vshrl.u32 2475754826, %v616
  %v620 = vor.u32 %v618, %v619
  %v621 = vshll.u32 2475754826, %v615
  %v622 = vshrl.u32 2131351028, %v616
  %v623 = vor.u32 %v621, %v622
  %v624 = vshll.u32 2131351028, %v615
  %v625 = vshrl.u32 2102212464, %v616
  %v626 = vor.u32 %v624, %v625
  %v627 = vshll.u32 2102212464, %v615
  %v628 = vshrl.u32 920167782, %v616
  %v629 = vor.u32 %v627, %v628
  %v630 = vshll.u32 920167782, %v615
  %v631 = vshrl.u32 1326507024, %v616
  %v632 = vor.u32 %v630, %v631
  %vm633 = vcmp.lt.s32.totalorder %v614, 1
  %vm634 = vcmp.lt.s32.totalorder %v614, 2
  %vm635 = vcmp.lt.s32.totalorder %v614, 3
  %vm636 = vcmp.lt.s32.totalorder %v614, 4
  %v637 = vsel %vm633, %v617, %v620
  %v638 = vsel %vm636, %v626, 2102212464
  %v639 = vsel %vm635, %v623, %v638
  %v640 = vsel %vm634, %v637, %v639
  %v641 = vsel %vm633, %v620, %v623
  %v642 = vsel %vm636, %v629, 920167782
  %v643 = vsel %vm635, %v626, %v642
  %v644 = vsel %vm634, %v641, %v643
  %v645 = vsel %vm633, %v623, %v626
  %v646 = vsel %vm636, %v632, 1326507024
  %v647 = vsel %vm635, %v629, %v646
  %v648 = vsel %vm634, %v645, %v647
  %v649 = vshll.u32 %v609, 8
  %v650 = vand.u32 %v649, 65535
  %v651 = vshrl.u32 %v649, 16
  %v652 = vand.u32 %v648, 65535
  %v653 = vshrl.u32 %v648, 16
  %v654 = vmul.u32 %v650, %v652
  %v655 = vmul.u32 %v650, %v653
  %v656 = vmul.u32 %v651, %v652
  %v657 = vmul.u32 %v651, %v653
  %v658 = vshll.u32 %v655, 16
  %v659 = vshrl.u32 %v655, 16
  %v660 = vshll.u32 %v656, 16
  %v661 = vshrl.u32 %v656, 16
  %vm662 = vc.u32 %v654, %v658
  %v663 = vsel %vm662, 1, 0
  %v664 = vadd.s32 %v654, %v658
  %v665 = vadd.s32 %v657, %v663
  %vm666 = vc.u32 %v664, %v660
  %v667 = vsel %vm666, 1, 0
  %v668 = vadd.s32 %v664, %v660
  %v669 = vadd.s32 %v665, %v667
  %v670 = vadd.s32 %v669, %v659
  %v671 = vadd.s32 %v670, %v661
  %v672 = vand.u32 %v649, 65535
  %v673 = vshrl.u32 %v649, 16
  %v674 = vand.u32 %v644, 65535
  %v675 = vshrl.u32 %v644, 16
  %v676 = vmul.u32 %v672, %v674
  %v677 = vmul.u32 %v672, %v675
  %v678 = vmul.u32 %v673, %v674
  %v679 = vmul.u32 %v673, %v675
  %v680 = vshll.u32 %v677, 16
  %v681 = vshrl.u32 %v677, 16
  %v682 = vshll.u32 %v678, 16
  %v683 = vshrl.u32 %v678, 16
  %vm684 = vc.u32 %v676, %v680
  %v685 = vsel %vm684, 1, 0
  %v686 = vadd.s32 %v676, %v680
  %v687 = vadd.s32 %v679, %v685
  %vm688 = vc.u32 %v686, %v682
  %v689 = vsel %vm688, 1, 0
  %v690 = vadd.s32 %v686, %v682
  %v691 = vadd.s32 %v687, %v689
  %v692 = vadd.s32 %v691, %v681
  %v693 = vadd.s32 %v692, %v683
  %v694 = vmul.u32 %v649, %v640
  %v695 = vadd.s32 %v671, %v690
  %vm696 = vc.u32 %v671, %v690
  %v697 = vadd.s32 %v693, 1
  %v698 = vsel %vm696, %v697, %v693
  %v699 = vadd.s32 %v694, %v698
  %v700 = vadd.s32 %v699, 536870912
  %v701 = vshrl.u32 %v700, 30
  %v702 = vshll.u32 %v701, 30
  %v703 = vsub.s32 %v699, %v702
  %vm704 = vcmp.lt.s32.totalorder %v703, 0
  %v705 = vsub.s32 0, %v703
  %v706 = vsel %vm704, %v705, %v703
  %v707 = vclz %v706
  %v708 = vsub.s32 %v707, 2
  %vm709 = vcmp.gt.s32.totalorder 0, %v708
  %v710 = vsel %vm709, 0, %v708
  %v711 = vsub.s32 32, %v710
  %v712 = vshll.u32 %v703, %v710
  %v713 = vshrl.u32 %v695, %v711
  %v714 = vor.u32 %v712, %v713
  %v715 = vsub.s32 4294967266, %v710
  %v716 = vadd.s32 %v715, 127
  %v717 = vshll.u32 %v716, 23
  %v718 = vor.u32 4788187, %v717
  %v719 = vand.u32 2147483647, %v718
  %v721 = vcvt.s32.f32 %v714
  %v722 = vmul.f32 %v721, %v719
  %v723 = vxor.u32 %v722, 2147483648
  %v724 = vsel %vm603, %v723, %v722
  %v725 = vsub.s32 4, %v701
  %v726 = vsel %vm603, %v725, %v701
  %v727 = vsel %vm602, %v138, %v724
  %v728 = vsel %vm602, 0, %v726
  %v729 = vmul.f32 %v727, %v727
  %v730 = vmul.f32 %v729, -0.001358992
  %v731 = vadd.f32 %v730, 0.041655596
  %v732 = vmul.f32 %v729, %v731
  %v733 = vadd.f32 %v732, -0.4999988
  %v734 = vmul.f32 %v729, %v733
  %v735 = vadd.f32 1.0, %v734
  %v736 = vmul.f32 %v727, %v727
  %v737 = vmul.f32 %v736, -0.00019511016
  %v738 = vadd.f32 %v737, 0.008332121
  %v739 = vmul.f32 %v736, %v738
  %v740 = vadd.f32 %v739, -0.16666654
  %v741 = vmul.f32 %v736, %v740
  %v742 = vadd.f32 %v741, 1.0
  %v743 = vmul.f32 %v742, %v727
  %vm744 = vweird.f32 %v138
  %v745 = vand.u32 %v728, 3
  %vm746 = vcmp.lt.s32.totalorder %v745, 2
  %vm747 = vcmp.eq.s32.totalorder %v745, 0
  %v748 = vxor.u32 %v743, 2147483648
  %v749 = vsel %vm747, %v735, %v748
  %vm750 = vcmp.eq.s32.totalorder %v745, 2
  %v751 = vxor.u32 %v735, 2147483648
  %v752 = vsel %vm750, %v751, %v743
  %v753 = vsel %vm746, %v749, %v752
  %v754 = vsel %vm744, nan, %v753
  %v755 = vand.u32 2147483647, %v135
  %vm756 = vcmp.le.f32.partialorder %v755, 0.7853982
  %vm757 = vcmp.lt.s32.totalorder %v135, 0
  %v758 = vand.u32 %v135, 2139095040
  %v759 = vshrl.u32 %v758, 23
  %v760 = vsub.s32 %v759, 127
  %v761 = vand.u32 2147483647, %v135
  %v762 = vand.u32 %v761, 8388607
  %v763 = vor.u32 %v762, 8388608
  %v764 = vsub.s32 0, %v763
  %v765 = vadd.s32 %v760, 1
  %vm766 = vcmp.gt.s32.totalorder %v765, 0
  %v767 = vsel %vm766, %v765, 0
  %v768 = vshrl.u32 %v767, 5
  %v769 = vand.u32 %v767, 31
  %v770 = vsub.s32 32, %v769
  %v771 = vshrl.u32 683565275, %v770
  %v772 = vshll.u32 683565275, %v769
  %v773 = vshrl.u32 2475754826, %v770
  %v774 = vor.u32 %v772, %v773
  %v775 = vshll.u32 2475754826, %v769
  %v776 = vshrl.u32 2131351028, %v770
  %v777 = vor.u32 %v775, %v776
  %v778 = vshll.u32 2131351028, %v769
  %v779 = vshrl.u32 2102212464, %v770
  %v780 = vor.u32 %v778, %v779
  %v781 = vshll.u32 2102212464, %v769
  %v782 = vshrl.u32 920167782, %v770
  %v783 = vor.u32 %v781, %v782
  %v784 = vshll.u32 920167782, %v769
  %v785 = vshrl.u32 1326507024, %v770
  %v786 = vor.u32 %v784, %v785
  %vm787 = vcmp.lt.s32.totalorder %v768, 1
  %vm788 = vcmp.lt.s32.totalorder %v768, 2
  %vm789 = vcmp.lt.s32.totalorder %v768, 3
  %vm790 = vcmp.lt.s32.totalorder %v768, 4
  %v791 = vsel %vm787, %v771, %v774
  %v792 = vsel %vm790, %v780, 2102212464
  %v793 = vsel %vm789, %v777, %v792
  %v794 = vsel %vm788, %v791, %v793
  %v795 = vsel %vm787, %v774, %v777
  %v796 = vsel %vm790, %v783, 920167782
  %v797 = vsel %vm789, %v780, %v796
  %v798 = vsel %vm788, %v795, %v797
  %v799 = vsel %vm787, %v777, %v780
  %v800 = vsel %vm790, %v786, 1326507024
  %v801 = vsel %vm789, %v783, %v800
  %v802 = vsel %vm788, %v799, %v801
  %v803 = vshll.u32 %v763, 8
  %v804 = vand.u32 %v803, 65535
  %v805 = vshrl.u32 %v803, 16
  %v806 = vand.u32 %v802, 65535
  %v807 = vshrl.u32 %v802, 16
  %v808 = vmul.u32 %v804, %v806
  %v809 = vmul.u32 %v804, %v807
  %v810 = vmul.u32 %v805, %v806
  %v811 = vmul.u32 %v805, %v807
  %v812 = vshll.u32 %v809, 16
  %v813 = vshrl.u32 %v809, 16
  %v814 = vshll.u32 %v810, 16
  %v815 = vshrl.u32 %v810, 16
  %vm816 = vc.u32 %v808, %v812
  %v817 = vsel %vm816, 1, 0
  %v818 = vadd.s32 %v808, %v812
  %v819 = vadd.s32 %v811, %v817
  %vm820 = vc.u32 %v818, %v814
  %v821 = vsel %vm820, 1, 0
  %v822 = vadd.s32 %v818, %v814
  %v823 = vadd.s32 %v819, %v821
  %v824 = vadd.s32 %v823, %v813
  %v825 = vadd.s32 %v824, %v815
  %v826 = vand.u32 %v803, 65535
  %v827 = vshrl.u32 %v803, 16
  %v828 = vand.u32 %v798, 65535
  %v829 = vshrl.u32 %v798, 16
  %v830 = vmul.u32 %v826, %v828
  %v831 = vmul.u32 %v826, %v829
  %v832 = vmul.u32 %v827, %v828
  %v833 = vmul.u32 %v827, %v829
  %v834 = vshll.u32 %v831, 16
  %v835 = vshrl.u32 %v831, 16
  %v836 = vshll.u32 %v832, 16
  %v837 = vshrl.u32 %v832, 16
  %vm838 = vc.u32 %v830, %v834
  %v839 = vsel %vm838, 1, 0
  %v840 = vadd.s32 %v830, %v834
  %v841 = vadd.s32 %v833, %v839
  %vm842 = vc.u32 %v840, %v836
  %v843 = vsel %vm842, 1, 0
  %v844 = vadd.s32 %v840, %v836
  %v845 = vadd.s32 %v841, %v843
  %v846 = vadd.s32 %v845, %v835
  %v847 = vadd.s32 %v846, %v837
  %v848 = vmul.u32 %v803, %v794
  %v849 = vadd.s32 %v825, %v844
  %vm850 = vc.u32 %v825, %v844
  %v851 = vadd.s32 %v847, 1
  %v852 = vsel %vm850, %v851, %v847
  %v853 = vadd.s32 %v848, %v852
  %v854 = vadd.s32 %v853, 536870912
  %v855 = vshrl.u32 %v854, 30
  %v856 = vshll.u32 %v855, 30
  %v857 = vsub.s32 %v853, %v856
  %vm858 = vcmp.lt.s32.totalorder %v857, 0
  %v859 = vsub.s32 0, %v857
  %v860 = vsel %vm858, %v859, %v857
  %v861 = vclz %v860
  %v862 = vsub.s32 %v861, 2
  %vm863 = vcmp.gt.s32.totalorder 0, %v862
  %v864 = vsel %vm863, 0, %v862
  %v865 = vsub.s32 32, %v864
  %v866 = vshll.u32 %v857, %v864
  %v867 = vshrl.u32 %v849, %v865
  %v868 = vor.u32 %v866, %v867
  %v869 = vsub.s32 4294967266, %v864
  %v870 = vadd.s32 %v869, 127
  %v871 = vshll.u32 %v870, 23
  %v872 = vor.u32 4788187, %v871
  %v873 = vand.u32 2147483647, %v872
  %v875 = vcvt.s32.f32 %v868
  %v876 = vmul.f32 %v875, %v873
  %v877 = vxor.u32 %v876, 2147483648
  %v878 = vsel %vm757, %v877, %v876
  %v879 = vsub.s32 4, %v855
  %v880 = vsel %vm757, %v879, %v855
  %v881 = vsel %vm756, %v135, %v878
  %v882 = vsel %vm756, 0, %v880
  %v883 = vmul.f32 %v881, %v881
  %v884 = vmul.f32 %v883, -0.001358992
  %v885 = vadd.f32 %v884, 0.041655596
  %v886 = vmul.f32 %v883, %v885
  %v887 = vadd.f32 %v886, -0.4999988
  %v888 = vmul.f32 %v883, %v887
  %v889 = vadd.f32 1.0, %v888
  %v890 = vmul.f32 %v881, %v881
  %v891 = vmul.f32 %v890, -0.00019511016
  %v892 = vadd.f32 %v891, 0.008332121
  %v893 = vmul.f32 %v890, %v892
  %v894 = vadd.f32 %v893, -0.16666654
  %v895 = vmul.f32 %v890, %v894
  %v896 = vadd.f32 %v895, 1.0
  %v897 = vmul.f32 %v896, %v881
  %vm898 = vweird.f32 %v135
  %v899 = vadd.s32 %v882, 3
  %v900 = vand.u32 %v899, 3
  %vm901 = vcmp.lt.s32.totalorder %v900, 2
  %vm902 = vcmp.eq.s32.totalorder %v900, 0
  %v903 = vxor.u32 %v897, 2147483648
  %v904 = vsel %vm902, %v889, %v903
  %vm905 = vcmp.eq.s32.totalorder %v900, 2
  %v906 = vxor.u32 %v889, 2147483648
  %v907 = vsel %vm905, %v906, %v897
  %v908 = vsel %vm901, %v904, %v907
  %v909 = vsel %vm898, nan, %v908
  %v910 = vand.u32 2147483647, %v136
  %vm911 = vcmp.le.f32.partialorder %v910, 0.7853982
  %vm912 = vcmp.lt.s32.totalorder %v136, 0
  %v913 = vand.u32 %v136, 2139095040
  %v914 = vshrl.u32 %v913, 23
  %v915 = vsub.s32 %v914, 127
  %v916 = vand.u32 2147483647, %v136
  %v917 = vand.u32 %v916, 8388607
  %v918 = vor.u32 %v917, 8388608
  %v919 = vsub.s32 0, %v918
  %v920 = vadd.s32 %v915, 1
  %vm921 = vcmp.gt.s32.totalorder %v920, 0
  %v922 = vsel %vm921, %v920, 0
  %v923 = vshrl.u32 %v922, 5
  %v924 = vand.u32 %v922, 31
  %v925 = vsub.s32 32, %v924
  %v926 = vshrl.u32 683565275, %v925
  %v927 = vshll.u32 683565275, %v924
  %v928 = vshrl.u32 2475754826, %v925
  %v929 = vor.u32 %v927, %v928
  %v930 = vshll.u32 2475754826, %v924
  %v931 = vshrl.u32 2131351028, %v925
  %v932 = vor.u32 %v930, %v931
  %v933 = vshll.u32 2131351028, %v924
  %v934 = vshrl.u32 2102212464, %v925
  %v935 = vor.u32 %v933, %v934
  %v936 = vshll.u32 2102212464, %v924
  %v937 = vshrl.u32 920167782, %v925
  %v938 = vor.u32 %v936, %v937
  %v939 = vshll.u32 920167782, %v924
  %v940 = vshrl.u32 1326507024, %v925
  %v941 = vor.u32 %v939, %v940
  %vm942 = vcmp.lt.s32.totalorder %v923, 1
  %vm943 = vcmp.lt.s32.totalorder %v923, 2
  %vm944 = vcmp.lt.s32.totalorder %v923, 3
  %vm945 = vcmp.lt.s32.totalorder %v923, 4
  %v946 = vsel %vm942, %v926, %v929
  %v947 = vsel %vm945, %v935, 2102212464
  %v948 = vsel %vm944, %v932, %v947
  %v949 = vsel %vm943, %v946, %v948
  %v950 = vsel %vm942, %v929, %v932
  %v951 = vsel %vm945, %v938, 920167782
  %v952 = vsel %vm944, %v935, %v951
  %v953 = vsel %vm943, %v950, %v952
  %v954 = vsel %vm942, %v932, %v935
  %v955 = vsel %vm945, %v941, 1326507024
  %v956 = vsel %vm944, %v938, %v955
  %v957 = vsel %vm943, %v954, %v956
  %v958 = vshll.u32 %v918, 8
  %v959 = vand.u32 %v958, 65535
  %v960 = vshrl.u32 %v958, 16
  %v961 = vand.u32 %v957, 65535
  %v962 = vshrl.u32 %v957, 16
  %v963 = vmul.u32 %v959, %v961
  %v964 = vmul.u32 %v959, %v962
  %v965 = vmul.u32 %v960, %v961
  %v966 = vmul.u32 %v960, %v962
  %v967 = vshll.u32 %v964, 16
  %v968 = vshrl.u32 %v964, 16
  %v969 = vshll.u32 %v965, 16
  %v970 = vshrl.u32 %v965, 16
  %vm971 = vc.u32 %v963, %v967
  %v972 = vsel %vm971, 1, 0
  %v973 = vadd.s32 %v963, %v967
  %v974 = vadd.s32 %v966, %v972
  %vm975 = vc.u32 %v973, %v969
  %v976 = vsel %vm975, 1, 0
  %v977 = vadd.s32 %v973, %v969
  %v978 = vadd.s32 %v974, %v976
  %v979 = vadd.s32 %v978, %v968
  %v980 = vadd.s32 %v979, %v970
  %v981 = vand.u32 %v958, 65535
  %v982 = vshrl.u32 %v958, 16
  %v983 = vand.u32 %v953, 65535
  %v984 = vshrl.u32 %v953, 16
  %v985 = vmul.u32 %v981, %v983
  %v986 = vmul.u32 %v981, %v984
  %v987 = vmul.u32 %v982, %v983
  %v988 = vmul.u32 %v982, %v984
  %v989 = vshll.u32 %v986, 16
  %v990 = vshrl.u32 %v986, 16
  %v991 = vshll.u32 %v987, 16
  %v992 = vshrl.u32 %v987, 16
  %vm993 = vc.u32 %v985, %v989
  %v994 = vsel %vm993, 1, 0
  %v995 = vadd.s32 %v985, %v989
  %v996 = vadd.s32 %v988, %v994
  %vm997 = vc.u32 %v995, %v991
  %v998 = vsel %vm997, 1, 0
  %v999 = vadd.s32 %v995, %v991
  %v1000 = vadd.s32 %v996, %v998
  %v1001 = vadd.s32 %v1000, %v990
  %v1002 = vadd.s32 %v1001, %v992
  %v1003 = vmul.u32 %v958, %v949
  %v1004 = vadd.s32 %v980, %v999
  %vm1005 = vc.u32 %v980, %v999
  %v1006 = vadd.s32 %v1002, 1
  %v1007 = vsel %vm1005, %v1006, %v1002
  %v1008 = vadd.s32 %v1003, %v1007
  %v1009 = vadd.s32 %v1008, 536870912
  %v1010 = vshrl.u32 %v1009, 30
  %v1011 = vshll.u32 %v1010, 30
  %v1012 = vsub.s32 %v1008, %v1011
  %vm1013 = vcmp.lt.s32.totalorder %v1012, 0
  %v1014 = vsub.s32 0, %v1012
  %v1015 = vsel %vm1013, %v1014, %v1012
  %v1016 = vclz %v1015
  %v1017 = vsub.s32 %v1016, 2
  %vm1018 = vcmp.gt.s32.totalorder 0, %v1017
  %v1019 = vsel %vm1018, 0, %v1017
  %v1020 = vsub.s32 32, %v1019
  %v1021 = vshll.u32 %v1012, %v1019
  %v1022 = vshrl.u32 %v1004, %v1020
  %v1023 = vor.u32 %v1021, %v1022
  %v1024 = vsub.s32 4294967266, %v1019
  %v1025 = vadd.s32 %v1024, 127
  %v1026 = vshll.u32 %v1025, 23
  %v1027 = vor.u32 4788187, %v1026
  %v1028 = vand.u32 2147483647, %v1027
  %v1030 = vcvt.s32.f32 %v1023
  %v1031 = vmul.f32 %v1030, %v1028
  %v1032 = vxor.u32 %v1031, 2147483648
  %v1033 = vsel %vm912, %v1032, %v1031
  %v1034 = vsub.s32 4, %v1010
  %v1035 = vsel %vm912, %v1034, %v1010
  %v1036 = vsel %vm911, %v136, %v1033
  %v1037 = vsel %vm911, 0, %v1035
  %v1038 = vmul.f32 %v1036, %v1036
  %v1039 = vmul.f32 %v1038, -0.001358992
  %v1040 = vadd.f32 %v1039, 0.041655596
  %v1041 = vmul.f32 %v1038, %v1040
  %v1042 = vadd.f32 %v1041, -0.4999988
  %v1043 = vmul.f32 %v1038, %v1042
  %v1044 = vadd.f32 1.0, %v1043
  %v1045 = vmul.f32 %v1036, %v1036
  %v1046 = vmul.f32 %v1045, -0.00019511016
  %v1047 = vadd.f32 %v1046, 0.008332121
  %v1048 = vmul.f32 %v1045, %v1047
  %v1049 = vadd.f32 %v1048, -0.16666654
  %v1050 = vmul.f32 %v1045, %v1049
  %v1051 = vadd.f32 %v1050, 1.0
  %v1052 = vmul.f32 %v1051, %v1036
  %vm1053 = vweird.f32 %v136
  %v1054 = vadd.s32 %v1037, 3
  %v1055 = vand.u32 %v1054, 3
  %vm1056 = vcmp.lt.s32.totalorder %v1055, 2
  %vm1057 = vcmp.eq.s32.totalorder %v1055, 0
  %v1058 = vxor.u32 %v1052, 2147483648
  %v1059 = vsel %vm1057, %v1044, %v1058
  %vm1060 = vcmp.eq.s32.totalorder %v1055, 2
  %v1061 = vxor.u32 %v1044, 2147483648
  %v1062 = vsel %vm1060, %v1061, %v1052
  %v1063 = vsel %vm1056, %v1059, %v1062
  %v1064 = vsel %vm1053, nan, %v1063
  %v1065 = vand.u32 2147483647, %v137
  %vm1066 = vcmp.le.f32.partialorder %v1065, 0.7853982
  %vm1067 = vcmp.lt.s32.totalorder %v137, 0
  %v1068 = vand.u32 %v137, 2139095040
  %v1069 = vshrl.u32 %v1068, 23
  %v1070 = vsub.s32 %v1069, 127
  %v1071 = vand.u32 2147483647, %v137
  %v1072 = vand.u32 %v1071, 8388607
  %v1073 = vor.u32 %v1072, 8388608
  %v1074 = vsub.s32 0, %v1073
  %v1075 = vadd.s32 %v1070, 1
  %vm1076 = vcmp.gt.s32.totalorder %v1075, 0
  %v1077 = vsel %vm1076, %v1075, 0
  %v1078 = vshrl.u32 %v1077, 5
  %v1079 = vand.u32 %v1077, 31
  %v1080 = vsub.s32 32, %v1079
  %v1081 = vshrl.u32 683565275, %v1080
  %v1082 = vshll.u32 683565275, %v1079
  %v1083 = vshrl.u32 2475754826, %v1080
  %v1084 = vor.u32 %v1082, %v1083
  %v1085 = vshll.u32 2475754826, %v1079
  %v1086 = vshrl.u32 2131351028, %v1080
  %v1087 = vor.u32 %v1085, %v1086
  %v1088 = vshll.u32 2131351028, %v1079
  %v1089 = vshrl.u32 2102212464, %v1080
  %v1090 = vor.u32 %v1088, %v1089
  %v1091 = vshll.u32 2102212464, %v1079
  %v1092 = vshrl.u32 920167782, %v1080
  %v1093 = vor.u32 %v1091, %v1092
  %v1094 = vshll.u32 920167782, %v1079
  %v1095 = vshrl.u32 1326507024, %v1080
  %v1096 = vor.u32 %v1094, %v1095
  %vm1097 = vcmp.lt.s32.totalorder %v1078, 1
  %vm1098 = vcmp.lt.s32.totalorder %v1078, 2
  %vm1099 = vcmp.lt.s32.totalorder %v1078, 3
  %vm1100 = vcmp.lt.s32.totalorder %v1078, 4
  %v1101 = vsel %vm1097, %v1081, %v1084
  %v1102 = vsel %vm1100, %v1090, 2102212464
  %v1103 = vsel %vm1099, %v1087, %v1102
  %v1104 = vsel %vm1098, %v1101, %v1103
  %v1105 = vsel %vm1097, %v1084, %v1087
  %v1106 = vsel %vm1100, %v1093, 920167782
  %v1107 = vsel %vm1099, %v1090, %v1106
  %v1108 = vsel %vm1098, %v1105, %v1107
  %v1109 = vsel %vm1097, %v1087, %v1090
  %v1110 = vsel %vm1100, %v1096, 1326507024
  %v1111 = vsel %vm1099, %v1093, %v1110
  %v1112 = vsel %vm1098, %v1109, %v1111
  %v1113 = vshll.u32 %v1073, 8
  %v1114 = vand.u32 %v1113, 65535
  %v1115 = vshrl.u32 %v1113, 16
  %v1116 = vand.u32 %v1112, 65535
  %v1117 = vshrl.u32 %v1112, 16
  %v1118 = vmul.u32 %v1114, %v1116
  %v1119 = vmul.u32 %v1114, %v1117
  %v1120 = vmul.u32 %v1115, %v1116
  %v1121 = vmul.u32 %v1115, %v1117
  %v1122 = vshll.u32 %v1119, 16
  %v1123 = vshrl.u32 %v1119, 16
  %v1124 = vshll.u32 %v1120, 16
  %v1125 = vshrl.u32 %v1120, 16
  %vm1126 = vc.u32 %v1118, %v1122
  %v1127 = vsel %vm1126, 1, 0
  %v1128 = vadd.s32 %v1118, %v1122
  %v1129 = vadd.s32 %v1121, %v1127
  %vm1130 = vc.u32 %v1128, %v1124
  %v1131 = vsel %vm1130, 1, 0
  %v1132 = vadd.s32 %v1128, %v1124
  %v1133 = vadd.s32 %v1129, %v1131
  %v1134 = vadd.s32 %v1133, %v1123
  %v1135 = vadd.s32 %v1134, %v1125
  %v1136 = vand.u32 %v1113, 65535
  %v1137 = vshrl.u32 %v1113, 16
  %v1138 = vand.u32 %v1108, 65535
  %v1139 = vshrl.u32 %v1108, 16
  %v1140 = vmul.u32 %v1136, %v1138
  %v1141 = vmul.u32 %v1136, %v1139
  %v1142 = vmul.u32 %v1137, %v1138
  %v1143 = vmul.u32 %v1137, %v1139
  %v1144 = vshll.u32 %v1141, 16
  %v1145 = vshrl.u32 %v1141, 16
  %v1146 = vshll.u32 %v1142, 16
  %v1147 = vshrl.u32 %v1142, 16
  %vm1148 = vc.u32 %v1140, %v1144
  %v1149 = vsel %vm1148, 1, 0
  %v1150 = vadd.s32 %v1140, %v1144
  %v1151 = vadd.s32 %v1143, %v1149
  %vm1152 = vc.u32 %v1150, %v1146
  %v1153 = vsel %vm1152, 1, 0
  %v1154 = vadd.s32 %v1150, %v1146
  %v1155 = vadd.s32 %v1151, %v1153
  %v1156 = vadd.s32 %v1155, %v1145
  %v1157 = vadd.s32 %v1156, %v1147
  %v1158 = vmul.u32 %v1113, %v1104
  %v1159 = vadd.s32 %v1135, %v1154
  %vm1160 = vc.u32 %v1135, %v1154
  %v1161 = vadd.s32 %v1157, 1
  %v1162 = vsel %vm1160, %v1161, %v1157
  %v1163 = vadd.s32 %v1158, %v1162
  %v1164 = vadd.s32 %v1163, 536870912
  %v1165 = vshrl.u32 %v1164, 30
  %v1166 = vshll.u32 %v1165, 30
  %v1167 = vsub.s32 %v1163, %v1166
  %vm1168 = vcmp.lt.s32.totalorder %v1167, 0
  %v1169 = vsub.s32 0, %v1167
  %v1170 = vsel %vm1168, %v1169, %v1167
  %v1171 = vclz %v1170
  %v1172 = vsub.s32 %v1171, 2
  %vm1173 = vcmp.gt.s32.totalorder 0, %v1172
  %v1174 = vsel %vm1173, 0, %v1172
  %v1175 = vsub.s32 32, %v1174
  %v1176 = vshll.u32 %v1167, %v1174
  %v1177 = vshrl.u32 %v1159, %v1175
  %v1178 = vor.u32 %v1176, %v1177
  %v1179 = vsub.s32 4294967266, %v1174
  %v1180 = vadd.s32 %v1179, 127
  %v1181 = vshll.u32 %v1180, 23
  %v1182 = vor.u32 4788187, %v1181
  %v1183 = vand.u32 2147483647, %v1182
  %v1185 = vcvt.s32.f32 %v1178
  %v1186 = vmul.f32 %v1185, %v1183
  %v1187 = vxor.u32 %v1186, 2147483648
  %v1188 = vsel %vm1067, %v1187, %v1186
  %v1189 = vsub.s32 4, %v1165
  %v1190 = vsel %vm1067, %v1189, %v1165
  %v1191 = vsel %vm1066, %v137, %v1188
  %v1192 = vsel %vm1066, 0, %v1190
  %v1193 = vmul.f32 %v1191, %v1191
  %v1194 = vmul.f32 %v1193, -0.001358992
  %v1195 = vadd.f32 %v1194, 0.041655596
  %v1196 = vmul.f32 %v1193, %v1195
  %v1197 = vadd.f32 %v1196, -0.4999988
  %v1198 = vmul.f32 %v1193, %v1197
  %v1199 = vadd.f32 1.0, %v1198
  %v1200 = vmul.f32 %v1191, %v1191
  %v1201 = vmul.f32 %v1200, -0.00019511016
  %v1202 = vadd.f32 %v1201, 0.008332121
  %v1203 = vmul.f32 %v1200, %v1202
  %v1204 = vadd.f32 %v1203, -0.16666654
  %v1205 = vmul.f32 %v1200, %v1204
  %v1206 = vadd.f32 %v1205, 1.0
  %v1207 = vmul.f32 %v1206, %v1191
  %vm1208 = vweird.f32 %v137
  %v1209 = vadd.s32 %v1192, 3
  %v1210 = vand.u32 %v1209, 3
  %vm1211 = vcmp.lt.s32.totalorder %v1210, 2
  %vm1212 = vcmp.eq.s32.totalorder %v1210, 0
  %v1213 = vxor.u32 %v1207, 2147483648
  %v1214 = vsel %vm1212, %v1199, %v1213
  %vm1215 = vcmp.eq.s32.totalorder %v1210, 2
  %v1216 = vxor.u32 %v1199, 2147483648
  %v1217 = vsel %vm1215, %v1216, %v1207
  %v1218 = vsel %vm1211, %v1214, %v1217
  %v1219 = vsel %vm1208, nan, %v1218
  %v1220 = vand.u32 2147483647, %v138
  %vm1221 = vcmp.le.f32.partialorder %v1220, 0.7853982
  %vm1222 = vcmp.lt.s32.totalorder %v138, 0
  %v1223 = vand.u32 %v138, 2139095040
  %v1224 = vshrl.u32 %v1223, 23
  %v1225 = vsub.s32 %v1224, 127
  %v1226 = vand.u32 2147483647, %v138
  %v1227 = vand.u32 %v1226, 8388607
  %v1228 = vor.u32 %v1227, 8388608
  %v1229 = vsub.s32 0, %v1228
  %v1230 = vadd.s32 %v1225, 1
  %vm1231 = vcmp.gt.s32.totalorder %v1230, 0
  %v1232 = vsel %vm1231, %v1230, 0
  %v1233 = vshrl.u32 %v1232, 5
  %v1234 = vand.u32 %v1232, 31
  %v1235 = vsub.s32 32, %v1234
  %v1236 = vshrl.u32 683565275, %v1235
  %v1237 = vshll.u32 683565275, %v1234
  %v1238 = vshrl.u32 2475754826, %v1235
  %v1239 = vor.u32 %v1237, %v1238
  %v1240 = vshll.u32 2475754826, %v1234
  %v1241 = vshrl.u32 2131351028, %v1235
  %v1242 = vor.u32 %v1240, %v1241
  %v1243 = vshll.u32 2131351028, %v1234
  %v1244 = vshrl.u32 2102212464, %v1235
  %v1245 = vor.u32 %v1243, %v1244
  %v1246 = vshll.u32 2102212464, %v1234
  %v1247 = vshrl.u32 920167782, %v1235
  %v1248 = vor.u32 %v1246, %v1247
  %v1249 = vshll.u32 920167782, %v1234
  %v1250 = vshrl.u32 1326507024, %v1235
  %v1251 = vor.u32 %v1249, %v1250
  %vm1252 = vcmp.lt.s32.totalorder %v1233, 1
  %vm1253 = vcmp.lt.s32.totalorder %v1233, 2
  %vm1254 = vcmp.lt.s32.totalorder %v1233, 3
  %vm1255 = vcmp.lt.s32.totalorder %v1233, 4
  %v1256 = vsel %vm1252, %v1236, %v1239
  %v1257 = vsel %vm1255, %v1245, 2102212464
  %v1258 = vsel %vm1254, %v1242, %v1257
  %v1259 = vsel %vm1253, %v1256, %v1258
  %v1260 = vsel %vm1252, %v1239, %v1242
  %v1261 = vsel %vm1255, %v1248, 920167782
  %v1262 = vsel %vm1254, %v1245, %v1261
  %v1263 = vsel %vm1253, %v1260, %v1262
  %v1264 = vsel %vm1252, %v1242, %v1245
  %v1265 = vsel %vm1255, %v1251, 1326507024
  %v1266 = vsel %vm1254, %v1248, %v1265
  %v1267 = vsel %vm1253, %v1264, %v1266
  %v1268 = vshll.u32 %v1228, 8
  %v1269 = vand.u32 %v1268, 65535
  %v1270 = vshrl.u32 %v1268, 16
  %v1271 = vand.u32 %v1267, 65535
  %v1272 = vshrl.u32 %v1267, 16
  %v1273 = vmul.u32 %v1269, %v1271
  %v1274 = vmul.u32 %v1269, %v1272
  %v1275 = vmul.u32 %v1270, %v1271
  %v1276 = vmul.u32 %v1270, %v1272
  %v1277 = vshll.u32 %v1274, 16
  %v1278 = vshrl.u32 %v1274, 16
  %v1279 = vshll.u32 %v1275, 16
  %v1280 = vshrl.u32 %v1275, 16
  %vm1281 = vc.u32 %v1273, %v1277
  %v1282 = vsel %vm1281, 1, 0
  %v1283 = vadd.s32 %v1273, %v1277
  %v1284 = vadd.s32 %v1276, %v1282
  %vm1285 = vc.u32 %v1283, %v1279
  %v1286 = vsel %vm1285, 1, 0
  %v1287 = vadd.s32 %v1283, %v1279
  %v1288 = vadd.s32 %v1284, %v1286
  %v1289 = vadd.s32 %v1288, %v1278
  %v1290 = vadd.s32 %v1289, %v1280
  %v1291 = vand.u32 %v1268, 65535
  %v1292 = vshrl.u32 %v1268, 16
  %v1293 = vand.u32 %v1263, 65535
  %v1294 = vshrl.u32 %v1263, 16
  %v1295 = vmul.u32 %v1291, %v1293
  %v1296 = vmul.u32 %v1291, %v1294
  %v1297 = vmul.u32 %v1292, %v1293
  %v1298 = vmul.u32 %v1292, %v1294
  %v1299 = vshll.u32 %v1296, 16
  %v1300 = vshrl.u32 %v1296, 16
  %v1301 = vshll.u32 %v1297, 16
  %v1302 = vshrl.u32 %v1297, 16
  %vm1303 = vc.u32 %v1295, %v1299
  %v1304 = vsel %vm1303, 1, 0
  %v1305 = vadd.s32 %v1295, %v1299
  %v1306 = vadd.s32 %v1298, %v1304
  %vm1307 = vc.u32 %v1305, %v1301
  %v1308 = vsel %vm1307, 1, 0
  %v1309 = vadd.s32 %v1305, %v1301
  %v1310 = vadd.s32 %v1306, %v1308
  %v1311 = vadd.s32 %v1310, %v1300
  %v1312 = vadd.s32 %v1311, %v1302
  %v1313 = vmul.u32 %v1268, %v1259
  %v1314 = vadd.s32 %v1290, %v1309
  %vm1315 = vc.u32 %v1290, %v1309
  %v1316 = vadd.s32 %v1312, 1
  %v1317 = vsel %vm1315, %v1316, %v1312
  %v1318 = vadd.s32 %v1313, %v1317
  %v1319 = vadd.s32 %v1318, 536870912
  %v1320 = vshrl.u32 %v1319, 30
  %v1321 = vshll.u32 %v1320, 30
  %v1322 = vsub.s32 %v1318, %v1321
  %vm1323 = vcmp.lt.s32.totalorder %v1322, 0
  %v1324 = vsub.s32 0, %v1322
  %v1325 = vsel %vm1323, %v1324, %v1322
  %v1326 = vclz %v1325
  %v1327 = vsub.s32 %v1326, 2
  %vm1328 = vcmp.gt.s32.totalorder 0, %v1327
  %v1329 = vsel %vm1328, 0, %v1327
  %v1330 = vsub.s32 32, %v1329
  %v1331 = vshll.u32 %v1322, %v1329
  %v1332 = vshrl.u32 %v1314, %v1330
  %v1333 = vor.u32 %v1331, %v1332
  %v1334 = vsub.s32 4294967266, %v1329
  %v1335 = vadd.s32 %v1334, 127
  %v1336 = vshll.u32 %v1335, 23
  %v1337 = vor.u32 4788187, %v1336
  %v1338 = vand.u32 2147483647, %v1337
  %v1340 = vcvt.s32.f32 %v1333
  %v1341 = vmul.f32 %v1340, %v1338
  %v1342 = vxor.u32 %v1341, 2147483648
  %v1343 = vsel %vm1222, %v1342, %v1341
  %v1344 = vsub.s32 4, %v1320
  %v1345 = vsel %vm1222, %v1344, %v1320
  %v1346 = vsel %vm1221, %v138, %v1343
  %v1347 = vsel %vm1221, 0, %v1345
  %v1348 = vmul.f32 %v1346, %v1346
  %v1349 = vmul.f32 %v1348, -0.001358992
  %v1350 = vadd.f32 %v1349, 0.041655596
  %v1351 = vmul.f32 %v1348, %v1350
  %v1352 = vadd.f32 %v1351, -0.4999988
  %v1353 = vmul.f32 %v1348, %v1352
  %v1354 = vadd.f32 1.0, %v1353
  %v1355 = vmul.f32 %v1346, %v1346
  %v1356 = vmul.f32 %v1355, -0.00019511016
  %v1357 = vadd.f32 %v1356, 0.008332121
  %v1358 = vmul.f32 %v1355, %v1357
  %v1359 = vadd.f32 %v1358, -0.16666654
  %v1360 = vmul.f32 %v1355, %v1359
  %v1361 = vadd.f32 %v1360, 1.0
  %v1362 = vmul.f32 %v1361, %v1346
  %vm1363 = vweird.f32 %v138
  %v1364 = vadd.s32 %v1347, 3
  %v1365 = vand.u32 %v1364, 3
  %vm1366 = vcmp.lt.s32.totalorder %v1365, 2
  %vm1367 = vcmp.eq.s32.totalorder %v1365, 0
  %v1368 = vxor.u32 %v1362, 2147483648
  %v1369 = vsel %vm1367, %v1354, %v1368
  %vm1370 = vcmp.eq.s32.totalorder %v1365, 2
  %v1371 = vxor.u32 %v1354, 2147483648
  %v1372 = vsel %vm1370, %v1371, %v1362
  %v1373 = vsel %vm1366, %v1369, %v1372
  %v1374 = vsel %vm1363, nan, %v1373
  %v1375 = vsub.f32 %v909, %v292
  %v1376 = vsub.f32 %v1064, %v446
  %v1377 = vsub.f32 %v1219, %v600
  %v1378 = vsub.f32 %v1374, %v754
  %v1379 = vld [vmem:[%s2] sm:$0x1]
  %v1380 = vperm.slane %v1375, 0
  %v1381 = vperm.slane %v1376, 0
  %v1382 = vperm.slane %v1377, 0
  %v1383 = vperm.slane %v1378, 0
  %v1384 = vperm.slane %v1379, 0
  %v1386 = vlaneseq
  %v1387 = vshrl.u32 %v1386, 7
  %1389 = vset.pattern.permute.xlu0 %v1387
  %1390 = vperm.xlu0 %1389, %v1384
  %v1391 = vpop.permute.xlu0 %1390
  %v1392 = vlaneseq
  %v1393 = vshrl.u32 %v1392, 7
  %v1394 = vadd.s32 %v1393, 8
  %1395 = vset.pattern.permute.xlu0 %v1394
  %1396 = vperm.xlu0 %1395, %v1384
  %v1397 = vpop.permute.xlu0 %1396
  %v1398 = vlaneseq
  %v1399 = vshrl.u32 %v1398, 7
  %v1400 = vadd.s32 %v1399, 16
  %1401 = vset.pattern.permute.xlu0 %v1400
  %1402 = vperm.xlu0 %1401, %v1384
  %v1403 = vpop.permute.xlu0 %1402
  %v1404 = vlaneseq
  %v1405 = vshrl.u32 %v1404, 7
  %v1406 = vadd.s32 %v1405, 24
  %1407 = vset.pattern.permute.xlu0 %v1406
  %1408 = vperm.xlu0 %1407, %v1384
  %v1409 = vpop.permute.xlu0 %1408
  %v1414 = vmul.f32 %v1380, %v1391
  %v1415 = vmul.f32 %v1380, %v1397
  %v1416 = vmul.f32 %v1380, %v1403
  %v1417 = vmul.f32 %v1380, %v1409
  %v1418 = vmul.f32 %v1381, %v1391
  %v1419 = vmul.f32 %v1381, %v1397
  %v1420 = vmul.f32 %v1381, %v1403
  %v1421 = vmul.f32 %v1381, %v1409
  %v1422 = vmul.f32 %v1382, %v1391
  %v1423 = vmul.f32 %v1382, %v1397
  %v1424 = vmul.f32 %v1382, %v1403
  %v1425 = vmul.f32 %v1382, %v1409
  %v1426 = vmul.f32 %v1383, %v1391
  %v1427 = vmul.f32 %v1383, %v1397
  %v1428 = vmul.f32 %v1383, %v1403
  %v1429 = vmul.f32 %v1383, %v1409
  %v1430 = vperm.slane %v292, 0
  %v1431 = vperm.slane %v446, 0
  %v1432 = vperm.slane %v600, 0
  %v1433 = vperm.slane %v754, 0
  %v1434 = vadd.f32 %v1430, %v1414
  %v1435 = vadd.f32 %v1430, %v1415
  %v1436 = vadd.f32 %v1430, %v1416
  %v1437 = vadd.f32 %v1430, %v1417
  %v1438 = vadd.f32 %v1431, %v1418
  %v1439 = vadd.f32 %v1431, %v1419
  %v1440 = vadd.f32 %v1431, %v1420
  %v1441 = vadd.f32 %v1431, %v1421
  %v1442 = vadd.f32 %v1432, %v1422
  %v1443 = vadd.f32 %v1432, %v1423
  %v1444 = vadd.f32 %v1432, %v1424
  %v1445 = vadd.f32 %v1432, %v1425
  %v1446 = vadd.f32 %v1433, %v1426
  %v1447 = vadd.f32 %v1433, %v1427
  %v1448 = vadd.f32 %v1433, %v1428
  %v1449 = vadd.f32 %v1433, %v1429
  %v1450 = vld [vmem:[%s2 + $0x1] sm:$0x1]
  %v1451 = vperm.slane %v1375, 1
  %v1452 = vperm.slane %v1376, 1
  %v1453 = vperm.slane %v1377, 1
  %v1454 = vperm.slane %v1378, 1
  %v1455 = vperm.slane %v1450, 0
  %v1457 = vlaneseq
  %v1458 = vshrl.u32 %v1457, 7
  %1460 = vset.pattern.permute.xlu0 %v1458
  %1461 = vperm.xlu0 %1460, %v1455
  %v1462 = vpop.permute.xlu0 %1461
  %v1463 = vlaneseq
  %v1464 = vshrl.u32 %v1463, 7
  %v1465 = vadd.s32 %v1464, 8
  %1466 = vset.pattern.permute.xlu0 %v1465
  %1467 = vperm.xlu0 %1466, %v1455
  %v1468 = vpop.permute.xlu0 %1467
  %v1469 = vlaneseq
  %v1470 = vshrl.u32 %v1469, 7
  %v1471 = vadd.s32 %v1470, 16
  %1472 = vset.pattern.permute.xlu0 %v1471
  %1473 = vperm.xlu0 %1472, %v1455
  %v1474 = vpop.permute.xlu0 %1473
  %v1475 = vlaneseq
  %v1476 = vshrl.u32 %v1475, 7
  %v1477 = vadd.s32 %v1476, 24
  %1478 = vset.pattern.permute.xlu0 %v1477
  %1479 = vperm.xlu0 %1478, %v1455
  %v1480 = vpop.permute.xlu0 %1479
  %v1485 = vmul.f32 %v1451, %v1462
  %v1486 = vmul.f32 %v1451, %v1468
  %v1487 = vmul.f32 %v1451, %v1474
  %v1488 = vmul.f32 %v1451, %v1480
  %v1489 = vmul.f32 %v1452, %v1462
  %v1490 = vmul.f32 %v1452, %v1468
  %v1491 = vmul.f32 %v1452, %v1474
  %v1492 = vmul.f32 %v1452, %v1480
  %v1493 = vmul.f32 %v1453, %v1462
  %v1494 = vmul.f32 %v1453, %v1468
  %v1495 = vmul.f32 %v1453, %v1474
  %v1496 = vmul.f32 %v1453, %v1480
  %v1497 = vmul.f32 %v1454, %v1462
  %v1498 = vmul.f32 %v1454, %v1468
  %v1499 = vmul.f32 %v1454, %v1474
  %v1500 = vmul.f32 %v1454, %v1480
  %v1501 = vperm.slane %v292, 1
  %v1502 = vperm.slane %v446, 1
  %v1503 = vperm.slane %v600, 1
  %v1504 = vperm.slane %v754, 1
  %v1505 = vadd.f32 %v1501, %v1485
  %v1506 = vadd.f32 %v1501, %v1486
  %v1507 = vadd.f32 %v1501, %v1487
  %v1508 = vadd.f32 %v1501, %v1488
  %v1509 = vadd.f32 %v1502, %v1489
  %v1510 = vadd.f32 %v1502, %v1490
  %v1511 = vadd.f32 %v1502, %v1491
  %v1512 = vadd.f32 %v1502, %v1492
  %v1513 = vadd.f32 %v1503, %v1493
  %v1514 = vadd.f32 %v1503, %v1494
  %v1515 = vadd.f32 %v1503, %v1495
  %v1516 = vadd.f32 %v1503, %v1496
  %v1517 = vadd.f32 %v1504, %v1497
  %v1518 = vadd.f32 %v1504, %v1498
  %v1519 = vadd.f32 %v1504, %v1499
  %v1520 = vadd.f32 %v1504, %v1500
  %v1521 = vmul.f32 %v1434, %v1505
  %v1522 = vmul.f32 %v1435, %v1506
  %v1523 = vmul.f32 %v1436, %v1507
  %v1524 = vmul.f32 %v1437, %v1508
  %v1525 = vmul.f32 %v1438, %v1509
  %v1526 = vmul.f32 %v1439, %v1510
  %v1527 = vmul.f32 %v1440, %v1511
  %v1528 = vmul.f32 %v1441, %v1512
  %v1529 = vmul.f32 %v1442, %v1513
  %v1530 = vmul.f32 %v1443, %v1514
  %v1531 = vmul.f32 %v1444, %v1515
  %v1532 = vmul.f32 %v1445, %v1516
  %v1533 = vmul.f32 %v1446, %v1517
  %v1534 = vmul.f32 %v1447, %v1518
  %v1535 = vmul.f32 %v1448, %v1519
  %v1536 = vmul.f32 %v1449, %v1520
  %v1537 = vld [vmem:[%s2 + $0x2] sm:$0x1]
  %v1538 = vperm.slane %v1375, 2
  %v1539 = vperm.slane %v1376, 2
  %v1540 = vperm.slane %v1377, 2
  %v1541 = vperm.slane %v1378, 2
  %v1542 = vperm.slane %v1537, 0
  %v1544 = vlaneseq
  %v1545 = vshrl.u32 %v1544, 7
  %1547 = vset.pattern.permute.xlu0 %v1545
  %1548 = vperm.xlu0 %1547, %v1542
  %v1549 = vpop.permute.xlu0 %1548
  %v1550 = vlaneseq
  %v1551 = vshrl.u32 %v1550, 7
  %v1552 = vadd.s32 %v1551, 8
  %1553 = vset.pattern.permute.xlu0 %v1552
  %1554 = vperm.xlu0 %1553, %v1542
  %v1555 = vpop.permute.xlu0 %1554
  %v1556 = vlaneseq
  %v1557 = vshrl.u32 %v1556, 7
  %v1558 = vadd.s32 %v1557, 16
  %1559 = vset.pattern.permute.xlu0 %v1558
  %1560 = vperm.xlu0 %1559, %v1542
  %v1561 = vpop.permute.xlu0 %1560
  %v1562 = vlaneseq
  %v1563 = vshrl.u32 %v1562, 7
  %v1564 = vadd.s32 %v1563, 24
  %1565 = vset.pattern.permute.xlu0 %v1564
  %1566 = vperm.xlu0 %1565, %v1542
  %v1567 = vpop.permute.xlu0 %1566
  %v1572 = vmul.f32 %v1538, %v1549
  %v1573 = vmul.f32 %v1538, %v1555
  %v1574 = vmul.f32 %v1538, %v1561
  %v1575 = vmul.f32 %v1538, %v1567
  %v1576 = vmul.f32 %v1539, %v1549
  %v1577 = vmul.f32 %v1539, %v1555
  %v1578 = vmul.f32 %v1539, %v1561
  %v1579 = vmul.f32 %v1539, %v1567
  %v1580 = vmul.f32 %v1540, %v1549
  %v1581 = vmul.f32 %v1540, %v1555
  %v1582 = vmul.f32 %v1540, %v1561
  %v1583 = vmul.f32 %v1540, %v1567
  %v1584 = vmul.f32 %v1541, %v1549
  %v1585 = vmul.f32 %v1541, %v1555
  %v1586 = vmul.f32 %v1541, %v1561
  %v1587 = vmul.f32 %v1541, %v1567
  %v1588 = vperm.slane %v292, 2
  %v1589 = vperm.slane %v446, 2
  %v1590 = vperm.slane %v600, 2
  %v1591 = vperm.slane %v754, 2
  %v1592 = vadd.f32 %v1588, %v1572
  %v1593 = vadd.f32 %v1588, %v1573
  %v1594 = vadd.f32 %v1588, %v1574
  %v1595 = vadd.f32 %v1588, %v1575
  %v1596 = vadd.f32 %v1589, %v1576
  %v1597 = vadd.f32 %v1589, %v1577
  %v1598 = vadd.f32 %v1589, %v1578
  %v1599 = vadd.f32 %v1589, %v1579
  %v1600 = vadd.f32 %v1590, %v1580
  %v1601 = vadd.f32 %v1590, %v1581
  %v1602 = vadd.f32 %v1590, %v1582
  %v1603 = vadd.f32 %v1590, %v1583
  %v1604 = vadd.f32 %v1591, %v1584
  %v1605 = vadd.f32 %v1591, %v1585
  %v1606 = vadd.f32 %v1591, %v1586
  %v1607 = vadd.f32 %v1591, %v1587
  %v1608 = vmul.f32 %v1521, %v1592
  %v1609 = vmul.f32 %v1522, %v1593
  %v1610 = vmul.f32 %v1523, %v1594
  %v1611 = vmul.f32 %v1524, %v1595
  %v1612 = vmul.f32 %v1525, %v1596
  %v1613 = vmul.f32 %v1526, %v1597
  %v1614 = vmul.f32 %v1527, %v1598
  %v1615 = vmul.f32 %v1528, %v1599
  %v1616 = vmul.f32 %v1529, %v1600
  %v1617 = vmul.f32 %v1530, %v1601
  %v1618 = vmul.f32 %v1531, %v1602
  %v1619 = vmul.f32 %v1532, %v1603
  %v1620 = vmul.f32 %v1533, %v1604
  %v1621 = vmul.f32 %v1534, %v1605
  %v1622 = vmul.f32 %v1535, %v1606
  %v1623 = vmul.f32 %v1536, %v1607
  %v1624 = vld [vmem:[%s2 + $0x3] sm:$0x1]
  %v1625 = vperm.slane %v1375, 3
  %v1626 = vperm.slane %v1376, 3
  %v1627 = vperm.slane %v1377, 3
  %v1628 = vperm.slane %v1378, 3
  %v1629 = vperm.slane %v1624, 0
  %v1631 = vlaneseq
  %v1632 = vshrl.u32 %v1631, 7
  %1634 = vset.pattern.permute.xlu0 %v1632
  %1635 = vperm.xlu0 %1634, %v1629
  %v1636 = vpop.permute.xlu0 %1635
  %v1637 = vlaneseq
  %v1638 = vshrl.u32 %v1637, 7
  %v1639 = vadd.s32 %v1638, 8
  %1640 = vset.pattern.permute.xlu0 %v1639
  %1641 = vperm.xlu0 %1640, %v1629
  %v1642 = vpop.permute.xlu0 %1641
  %v1643 = vlaneseq
  %v1644 = vshrl.u32 %v1643, 7
  %v1645 = vadd.s32 %v1644, 16
  %1646 = vset.pattern.permute.xlu0 %v1645
  %1647 = vperm.xlu0 %1646, %v1629
  %v1648 = vpop.permute.xlu0 %1647
  %v1649 = vlaneseq
  %v1650 = vshrl.u32 %v1649, 7
  %v1651 = vadd.s32 %v1650, 24
  %1652 = vset.pattern.permute.xlu0 %v1651
  %1653 = vperm.xlu0 %1652, %v1629
  %v1654 = vpop.permute.xlu0 %1653
  %v1659 = vmul.f32 %v1625, %v1636
  %v1660 = vmul.f32 %v1625, %v1642
  %v1661 = vmul.f32 %v1625, %v1648
  %v1662 = vmul.f32 %v1625, %v1654
  %v1663 = vmul.f32 %v1626, %v1636
  %v1664 = vmul.f32 %v1626, %v1642
  %v1665 = vmul.f32 %v1626, %v1648
  %v1666 = vmul.f32 %v1626, %v1654
  %v1667 = vmul.f32 %v1627, %v1636
  %v1668 = vmul.f32 %v1627, %v1642
  %v1669 = vmul.f32 %v1627, %v1648
  %v1670 = vmul.f32 %v1627, %v1654
  %v1671 = vmul.f32 %v1628, %v1636
  %v1672 = vmul.f32 %v1628, %v1642
  %v1673 = vmul.f32 %v1628, %v1648
  %v1674 = vmul.f32 %v1628, %v1654
  %v1675 = vperm.slane %v292, 3
  %v1676 = vperm.slane %v446, 3
  %v1677 = vperm.slane %v600, 3
  %v1678 = vperm.slane %v754, 3
  %v1679 = vadd.f32 %v1675, %v1659
  %v1680 = vadd.f32 %v1675, %v1660
  %v1681 = vadd.f32 %v1675, %v1661
  %v1682 = vadd.f32 %v1675, %v1662
  %v1683 = vadd.f32 %v1676, %v1663
  %v1684 = vadd.f32 %v1676, %v1664
  %v1685 = vadd.f32 %v1676, %v1665
  %v1686 = vadd.f32 %v1676, %v1666
  %v1687 = vadd.f32 %v1677, %v1667
  %v1688 = vadd.f32 %v1677, %v1668
  %v1689 = vadd.f32 %v1677, %v1669
  %v1690 = vadd.f32 %v1677, %v1670
  %v1691 = vadd.f32 %v1678, %v1671
  %v1692 = vadd.f32 %v1678, %v1672
  %v1693 = vadd.f32 %v1678, %v1673
  %v1694 = vadd.f32 %v1678, %v1674
  %v1695 = vmul.f32 %v1608, %v1679
  %v1696 = vmul.f32 %v1609, %v1680
  %v1697 = vmul.f32 %v1610, %v1681
  %v1698 = vmul.f32 %v1611, %v1682
  %v1699 = vmul.f32 %v1612, %v1683
  %v1700 = vmul.f32 %v1613, %v1684
  %v1701 = vmul.f32 %v1614, %v1685
  %v1702 = vmul.f32 %v1615, %v1686
  %v1703 = vmul.f32 %v1616, %v1687
  %v1704 = vmul.f32 %v1617, %v1688
  %v1705 = vmul.f32 %v1618, %v1689
  %v1706 = vmul.f32 %v1619, %v1690
  %v1707 = vmul.f32 %v1620, %v1691
  %v1708 = vmul.f32 %v1621, %v1692
  %v1709 = vmul.f32 %v1622, %v1693
  %v1710 = vmul.f32 %v1623, %v1694
  %v1711 = vld [vmem:[%s2 + $0x8] sm:$0xff]
  %v1712 = vld [vmem:[%s2 + $0x10] sm:$0xff]
  %v1713 = vld [vmem:[%s2 + $0x18] sm:$0xff]
  %v1714 = vld [vmem:[%s2 + $0x20] sm:$0xff]
  %1731 = vset.pattern.permute.xlu0 0
  %1732 = vperm.xlu0 %1731, %v1695
  %v1733 = vpop.permute.xlu0 %1732
  %1734 = vset.pattern.permute.xlu0 0
  %1735 = vperm.xlu0 %1734, %v1696
  %v1736 = vpop.permute.xlu0 %1735
  %1737 = vset.pattern.permute.xlu0 0
  %1738 = vperm.xlu0 %1737, %v1697
  %v1739 = vpop.permute.xlu0 %1738
  %1740 = vset.pattern.permute.xlu0 0
  %1741 = vperm.xlu0 %1740, %v1698
  %v1742 = vpop.permute.xlu0 %1741
  %1743 = vset.pattern.permute.xlu0 0
  %1744 = vperm.xlu0 %1743, %v1699
  %v1745 = vpop.permute.xlu0 %1744
  %1746 = vset.pattern.permute.xlu0 0
  %1747 = vperm.xlu0 %1746, %v1700
  %v1748 = vpop.permute.xlu0 %1747
  %1749 = vset.pattern.permute.xlu0 0
  %1750 = vperm.xlu0 %1749, %v1701
  %v1751 = vpop.permute.xlu0 %1750
  %1752 = vset.pattern.permute.xlu0 0
  %1753 = vperm.xlu0 %1752, %v1702
  %v1754 = vpop.permute.xlu0 %1753
  %1755 = vset.pattern.permute.xlu0 0
  %1756 = vperm.xlu0 %1755, %v1703
  %v1757 = vpop.permute.xlu0 %1756
  %1758 = vset.pattern.permute.xlu0 0
  %1759 = vperm.xlu0 %1758, %v1704
  %v1760 = vpop.permute.xlu0 %1759
  %1761 = vset.pattern.permute.xlu0 0
  %1762 = vperm.xlu0 %1761, %v1705
  %v1763 = vpop.permute.xlu0 %1762
  %1764 = vset.pattern.permute.xlu0 0
  %1765 = vperm.xlu0 %1764, %v1706
  %v1766 = vpop.permute.xlu0 %1765
  %1767 = vset.pattern.permute.xlu0 0
  %1768 = vperm.xlu0 %1767, %v1707
  %v1769 = vpop.permute.xlu0 %1768
  %1770 = vset.pattern.permute.xlu0 0
  %1771 = vperm.xlu0 %1770, %v1708
  %v1772 = vpop.permute.xlu0 %1771
  %1773 = vset.pattern.permute.xlu0 0
  %1774 = vperm.xlu0 %1773, %v1709
  %v1775 = vpop.permute.xlu0 %1774
  %1776 = vset.pattern.permute.xlu0 0
  %1777 = vperm.xlu0 %1776, %v1710
  %v1778 = vpop.permute.xlu0 %1777
  %v1779 = vperm.slane %v1733, %v58
  %v1780 = vadd.s32 %v58, 4294967288
  %v1781 = vperm.slane %v1736, %v1780
  %vm1782 = vcmask 130112
  %v1783 = vsel %vm1782, %v1781, %v1779
  %v1784 = vadd.s32 %v58, 4294967280
  %v1785 = vperm.slane %v1739, %v1784
  %vm1786 = vcmask 195712
  %v1787 = vsel %vm1786, %v1785, %v1783
  %v1788 = vadd.s32 %v58, 4294967272
  %v1789 = vperm.slane %v1742, %v1788
  %vm1790 = vcmask 261312
  %v1791 = vsel %vm1790, %v1789, %v1787
  %v1792 = vperm.slane %v1745, %v58
  %v1793 = vperm.slane %v1748, %v1780
  %v1794 = vsel %vm1782, %v1793, %v1792
  %v1795 = vperm.slane %v1751, %v1784
  %v1796 = vsel %vm1786, %v1795, %v1794
  %v1797 = vperm.slane %v1754, %v1788
  %v1798 = vsel %vm1790, %v1797, %v1796
  %v1799 = vperm.slane %v1757, %v58
  %v1800 = vperm.slane %v1760, %v1780
  %v1801 = vsel %vm1782, %v1800, %v1799
  %v1802 = vperm.slane %v1763, %v1784
  %v1803 = vsel %vm1786, %v1802, %v1801
  %v1804 = vperm.slane %v1766, %v1788
  %v1805 = vsel %vm1790, %v1804, %v1803
  %v1806 = vperm.slane %v1769, %v58
  %v1807 = vperm.slane %v1772, %v1780
  %v1808 = vsel %vm1782, %v1807, %v1806
  %v1809 = vperm.slane %v1775, %v1784
  %v1810 = vsel %vm1786, %v1809, %v1808
  %v1811 = vperm.slane %v1778, %v1788
  %v1812 = vsel %vm1790, %v1811, %v1810
  %v1813 = vsel %vm63, %v1798, %v1791
  %v1814 = vsel %vm64, %v1805, %v1813
  %v1815 = vsel %vm66, %v1812, %v1814
  %vm1816 = vcmask 261120
  %v1817 = vsel %vm1816, %v1815, 0
  %1819 = vmatpush.msra.mxu0 0.0
  %1820 = vmatpush.msra.mxu0 0.0
  %1821 = vmatpush.msra.mxu0 0.0
  %1822 = vmatpush.msra.mxu0 0.0
  %1823 = vmatpush.msra.mxu0 0.0
  %1824 = vmatpush.msra.mxu0 0.0
  %1825 = vmatpush.msra.mxu0 0.0
  %1826 = vmatpush.msra.mxu0 0.0
  %1827 = vmatpush.msra.mxu0 0.0
  %1828 = vmatpush.msra.mxu0 0.0
  %1829 = vmatpush.msra.mxu0 0.0
  %1830 = vmatpush.msra.mxu0 0.0
  %v1831 = vand.u32 %v1714, 4294901760
  %1832 = vmatpush.msra.mxu0 %v1831
  %v1833 = vand.u32 %v1713, 4294901760
  %1834 = vmatpush.msra.mxu0 %v1833
  %v1835 = vand.u32 %v1712, 4294901760
  %1836 = vmatpush.msra.mxu0 %v1835
  %v1837 = vand.u32 %v1711, 4294901760
  %1838 = vmatpush.msra.mxu0 %v1837
  %v1839 = vand.u32 %v1817, 4294901760
  %v1840 = vsub.f32 %v1817, %v1839
  %v1841 = vand.u32 %v1840, 4294901760
  %v1842 = vsub.f32 %v1840, %v1841
  %v1843 = vand.u32 %v1842, 4294901760
  %1844 = vmatmul.f32.gmra.mxu0 %v1843
  %v1845 = vpop.f32.mrf.mxu0
  %v1846 = vadd.f32 0.0, %v1845
  %1847 = vdwg.mxu0
  %1848 = vmatpush.msra.mxu0 0.0
  %1849 = vmatpush.msra.mxu0 0.0
  %1850 = vmatpush.msra.mxu0 0.0
  %1851 = vmatpush.msra.mxu0 0.0
  %1852 = vmatpush.msra.mxu0 0.0
  %1853 = vmatpush.msra.mxu0 0.0
  %1854 = vmatpush.msra.mxu0 0.0
  %1855 = vmatpush.msra.mxu0 0.0
  %1856 = vmatpush.msra.mxu0 0.0
  %1857 = vmatpush.msra.mxu0 0.0
  %1858 = vmatpush.msra.mxu0 0.0
  %1859 = vmatpush.msra.mxu0 0.0
  %v1860 = vand.u32 %v1714, 4294901760
  %v1861 = vsub.f32 %v1714, %v1860
  %v1862 = vand.u32 %v1861, 4294901760
  %v1863 = vsub.f32 %v1861, %v1862
  %v1864 = vand.u32 %v1863, 4294901760
  %1865 = vmatpush.msra.mxu0 %v1864
  %v1866 = vand.u32 %v1713, 4294901760
  %v1867 = vsub.f32 %v1713, %v1866
  %v1868 = vand.u32 %v1867, 4294901760
  %v1869 = vsub.f32 %v1867, %v1868
  %v1870 = vand.u32 %v1869, 4294901760
  %1871 = vmatpush.msra.mxu0 %v1870
  %v1872 = vand.u32 %v1712, 4294901760
  %v1873 = vsub.f32 %v1712, %v1872
  %v1874 = vand.u32 %v1873, 4294901760
  %v1875 = vsub.f32 %v1873, %v1874
  %v1876 = vand.u32 %v1875, 4294901760
  %1877 = vmatpush.msra.mxu0 %v1876
  %v1878 = vand.u32 %v1711, 4294901760
  %v1879 = vsub.f32 %v1711, %v1878
  %v1880 = vand.u32 %v1879, 4294901760
  %v1881 = vsub.f32 %v1879, %v1880
  %v1882 = vand.u32 %v1881, 4294901760
  %1883 = vmatpush.msra.mxu0 %v1882
  %v1884 = vand.u32 %v1817, 4294901760
  %1885 = vmatmul.f32.gmra.mxu0 %v1884
  %v1886 = vpop.f32.mrf.mxu0
  %v1887 = vadd.f32 %v1846, %v1886
  %1888 = vdwg.mxu0
  %1889 = vmatpush.msra.mxu0 0.0
  %1890 = vmatpush.msra.mxu0 0.0
  %1891 = vmatpush.msra.mxu0 0.0
  %1892 = vmatpush.msra.mxu0 0.0
  %1893 = vmatpush.msra.mxu0 0.0
  %1894 = vmatpush.msra.mxu0 0.0
  %1895 = vmatpush.msra.mxu0 0.0
  %1896 = vmatpush.msra.mxu0 0.0
  %1897 = vmatpush.msra.mxu0 0.0
  %1898 = vmatpush.msra.mxu0 0.0
  %1899 = vmatpush.msra.mxu0 0.0
  %1900 = vmatpush.msra.mxu0 0.0
  %v1901 = vand.u32 %v1714, 4294901760
  %v1902 = vsub.f32 %v1714, %v1901
  %1903 = vmatpush.msra.mxu0 %v1902
  %v1904 = vand.u32 %v1713, 4294901760
  %v1905 = vsub.f32 %v1713, %v1904
  %1906 = vmatpush.msra.mxu0 %v1905
  %v1907 = vand.u32 %v1712, 4294901760
  %v1908 = vsub.f32 %v1712, %v1907
  %1909 = vmatpush.msra.mxu0 %v1908
  %v1910 = vand.u32 %v1711, 4294901760
  %v1911 = vsub.f32 %v1711, %v1910
  %1912 = vmatpush.msra.mxu0 %v1911
  %v1913 = vand.u32 %v1817, 4294901760
  %v1914 = vsub.f32 %v1817, %v1913
  %1915 = vmatmul.f32.gmra.mxu0 %v1914
  %v1916 = vpop.f32.mrf.mxu0
  %v1917 = vadd.f32 %v1887, %v1916
  %1918 = vdwg.mxu0
  %1919 = vmatpush.msra.mxu0 0.0
  %1920 = vmatpush.msra.mxu0 0.0
  %1921 = vmatpush.msra.mxu0 0.0
  %1922 = vmatpush.msra.mxu0 0.0
  %1923 = vmatpush.msra.mxu0 0.0
  %1924 = vmatpush.msra.mxu0 0.0
  %1925 = vmatpush.msra.mxu0 0.0
  %1926 = vmatpush.msra.mxu0 0.0
  %1927 = vmatpush.msra.mxu0 0.0
  %1928 = vmatpush.msra.mxu0 0.0
  %1929 = vmatpush.msra.mxu0 0.0
  %1930 = vmatpush.msra.mxu0 0.0
  %v1931 = vand.u32 %v1714, 4294901760
  %1932 = vmatpush.msra.mxu0 %v1931
  %v1933 = vand.u32 %v1713, 4294901760
  %1934 = vmatpush.msra.mxu0 %v1933
  %v1935 = vand.u32 %v1712, 4294901760
  %1936 = vmatpush.msra.mxu0 %v1935
  %v1937 = vand.u32 %v1711, 4294901760
  %1938 = vmatpush.msra.mxu0 %v1937
  %v1939 = vand.u32 %v1817, 4294901760
  %v1940 = vsub.f32 %v1817, %v1939
  %v1941 = vand.u32 %v1940, 4294901760
  %1942 = vmatmul.f32.gmra.mxu0 %v1941
  %v1943 = vpop.f32.mrf.mxu0
  %v1944 = vadd.f32 %v1917, %v1943
  %1945 = vdwg.mxu0
  %1946 = vmatpush.msra.mxu0 0.0
  %1947 = vmatpush.msra.mxu0 0.0
  %1948 = vmatpush.msra.mxu0 0.0
  %1949 = vmatpush.msra.mxu0 0.0
  %1950 = vmatpush.msra.mxu0 0.0
  %1951 = vmatpush.msra.mxu0 0.0
  %1952 = vmatpush.msra.mxu0 0.0
  %1953 = vmatpush.msra.mxu0 0.0
  %1954 = vmatpush.msra.mxu0 0.0
  %1955 = vmatpush.msra.mxu0 0.0
  %1956 = vmatpush.msra.mxu0 0.0
  %1957 = vmatpush.msra.mxu0 0.0
  %v1958 = vand.u32 %v1714, 4294901760
  %v1959 = vsub.f32 %v1714, %v1958
  %v1960 = vand.u32 %v1959, 4294901760
  %1961 = vmatpush.msra.mxu0 %v1960
  %v1962 = vand.u32 %v1713, 4294901760
  %v1963 = vsub.f32 %v1713, %v1962
  %v1964 = vand.u32 %v1963, 4294901760
  %1965 = vmatpush.msra.mxu0 %v1964
  %v1966 = vand.u32 %v1712, 4294901760
  %v1967 = vsub.f32 %v1712, %v1966
  %v1968 = vand.u32 %v1967, 4294901760
  %1969 = vmatpush.msra.mxu0 %v1968
  %v1970 = vand.u32 %v1711, 4294901760
  %v1971 = vsub.f32 %v1711, %v1970
  %v1972 = vand.u32 %v1971, 4294901760
  %1973 = vmatpush.msra.mxu0 %v1972
  %v1974 = vand.u32 %v1817, 4294901760
  %1975 = vmatmul.f32.gmra.mxu0 %v1974
  %v1976 = vpop.f32.mrf.mxu0
  %v1977 = vadd.f32 %v1944, %v1976
  %1978 = vdwg.mxu0
  %1979 = vmatpush.msra.mxu0 0.0
  %1980 = vmatpush.msra.mxu0 0.0
  %1981 = vmatpush.msra.mxu0 0.0
  %1982 = vmatpush.msra.mxu0 0.0
  %1983 = vmatpush.msra.mxu0 0.0
  %1984 = vmatpush.msra.mxu0 0.0
  %1985 = vmatpush.msra.mxu0 0.0
  %1986 = vmatpush.msra.mxu0 0.0
  %1987 = vmatpush.msra.mxu0 0.0
  %1988 = vmatpush.msra.mxu0 0.0
  %1989 = vmatpush.msra.mxu0 0.0
  %1990 = vmatpush.msra.mxu0 0.0
  %v1991 = vand.u32 %v1714, 4294901760
  %1992 = vmatpush.msra.mxu0 %v1991
  %v1993 = vand.u32 %v1713, 4294901760
  %1994 = vmatpush.msra.mxu0 %v1993
  %v1995 = vand.u32 %v1712, 4294901760
  %1996 = vmatpush.msra.mxu0 %v1995
  %v1997 = vand.u32 %v1711, 4294901760
  %1998 = vmatpush.msra.mxu0 %v1997
  %v1999 = vand.u32 %v1817, 4294901760
  %2000 = vmatmul.f32.gmra.mxu0 %v1999
  %v2001 = vpop.f32.mrf.mxu0
  %v2002 = vadd.f32 %v1977, %v2001
  %2003 = vdwg.mxu0
  %v2004 = vmul.f32 %v2002, %v2002
  %2006 = vrot.lane.b32.xlu0 %v2004, 112
  %v2007 = vpop.permute.xlu0 %2006
  %v2009 = vadd.f32 %v2004, %v2007
  %vm2010 = vcmask 125952
  %2011 = vst.msk [vmem:[%s3] sm:$0xf] %vm2010, %v2009
  // Predicated region
  $region14: #{_qellm_pallas.2} parent=0 // pred_check
    _
  $region15: #{_qellm_pallas.2} parent=0 // pred_check_branch
    %2013 = sbr.rel (0) target = $region17
  $region16: #{_qellm_pallas.2} parent=0 // pred_region
    _
  $region17: #{_qellm_pallas.2} parent=0 // pred_fallthru
    _
  // Predicated region
  $region18: #{_qellm_pallas.2} parent=0 // pred_check
    _
  $region19: #{_qellm_pallas.2} parent=0 // pred_check_branch
    %2015 = sbr.rel (0) target = $region21
  $region20: #{_qellm_pallas.2} parent=0 // pred_region
    _
  $region21: #{_qellm_pallas.2} parent=0 // pred_fallthru
    _

</llo_original>
